<compile_context>
chip_gen: v7x
topology: tpu7x:2x2x1
jax: 0.10.0
libtpu: 0.0.40
codegen_flags: <defaults>
</compile_context>

<pallas_src>
import functools

import jax
import jax.numpy as jnp
import numpy as np
from jax import lax
from jax.experimental import pallas as pl
from jax.experimental.pallas import tpu as pltpu


def _knn_kernel(pos_qt_ref, pos_c_ref, idx_ref, best_ref, *,
                k, dims, n, tile_m, tile_n, idx_bits):
    """Streaming k-NN for one (query-tile, candidate-chunk) grid step.

    pos_qt_ref : [D, TILE_M]      f32  query coordinates (transposed, lane-major)
    pos_c_ref  : [TILE_N, D]      f32  candidate chunk coordinates
    idx_ref    : [k, TILE_M]      i32  row j = index of the j-th nearest neighbor
    best_ref   : [K_PAD, TILE_M]  i32  running best packed keys (scratch)
    """
    t = pl.program_id(1)
    nt = pl.num_programs(1)
    q0 = pl.program_id(0) * tile_m
    c0 = t * tile_n

    int_max = jnp.int32(np.iinfo(np.int32).max)
    int_min = jnp.int32(np.iinfo(np.int32).min)
    low_mask = jnp.int32((1 << idx_bits) - 1)
    high_mask = jnp.int32(-(1 << idx_bits))

    # Initialize the running-best accumulator at the first candidate chunk.
    @pl.when(t == 0)
    def _():
        best_ref[...] = jnp.full_like(best_ref, int_max)

    # Pairwise squared distances via direct differences (D rank-1 VPU passes).
    # Candidates on sublanes, queries on lanes -> [TILE_N, TILE_M].
    d2 = None
    for c in range(dims):
        qc = pos_qt_ref[c:c + 1, :]          # [1, TILE_M]  lane-oriented row
        ac = pos_c_ref[:, c:c + 1]           # [TILE_N, 1]  sublane-oriented col
        diff = ac - qc                       # [TILE_N, TILE_M]
        d2 = diff * diff if d2 is None else d2 + diff * diff

    # Packed sort key: non-negative f32 bits are order-preserving as int32, so
    # stash the global candidate index in the low idx_bits mantissa bits; one
    # min then yields value + argmin together (ties broken by lowest index).
    cand = lax.broadcasted_iota(jnp.int32, (tile_n, tile_m), 0) + c0
    query_row = lax.broadcasted_iota(jnp.int32, (1, tile_m), 1) + q0  # [1, TILE_M]

    keys = (pltpu.bitcast(d2, jnp.int32) & high_mask) | cand
    keys = jnp.where(cand == query_row, int_max, keys)        # no self-loops
    if n % tile_n != 0:
        keys = jnp.where(cand >= n, int_max, keys)            # mask padded candidates

    # Read-only threshold-scan merge of (previous best, current chunk):
    # `keys` and `best_old` are immutable; each round takes the smallest key
    # strictly greater than the previous round's winner. Keys are globally
    # unique, so this is exactly the j-th nearest.
    # TODO(synk): multi-winner (2 or 4 per pass) compare-select sweep to cut
    # the number of full-chunk passes from k to k/2 or k/4.
    best_old = best_ref[...]                                  # [K_PAD, TILE_M]
    prev = int_min
    for j in range(k):
        cb = jnp.min(jnp.where(best_old > prev, best_old, int_max),
                     axis=0, keepdims=True)                   # [1, TILE_M]
        ck = jnp.min(jnp.where(keys > prev, keys, int_max),
                     axis=0, keepdims=True)                   # [1, TILE_M]
        best = jnp.minimum(cb, ck)
        best_ref[j, :] = best[0, :]
        prev = best

    # Finalize: strip the packed index out and store a lane-dense [k, TILE_M].
    @pl.when(t == nt - 1)
    def _():
        idx_ref[...] = best_ref[0:k, :] & low_mask


def aperiodic_knn_graph(datapoint: dict, k: int = 19, *, tile_n: int | None = None) -> dict:
    """JAX/Pallas equivalent of AperiodicKNN_PyG(k).forward(datapoint)."""
    pos = datapoint["pos"]                            # [N, D]
    n, dims = pos.shape
    assert 0 < k < n, "need at least k+1 nodes"

    # Bits reserved in the packed key for the candidate index. Exact distance
    # ordering requires these to stay inside the f32 mantissa noise floor.
    idx_bits = max(1, int(np.ceil(np.log2(n))))
    assert idx_bits <= 20, (
        "packed-key argmin only exact up to ~1M nodes; "
        "use an exact (value, index) pair reduction for larger graphs")
    # TODO(synk): paired (value, index) compare-select reduction fallback for n > 2**20.

    pos_f32 = pos.astype(jnp.float32)
    pos_t = pos_f32.T                                 # [D, N]

    # Query tile: multiple of 128 or full N (lane rule). Bump to 256 on
    # 128 MiB-class VMEM parts (v5e/v6e) to amortize per-grid-step overhead.
    tile_m = n if n <= 128 else 128
    try:
        big_vmem = pltpu.get_tpu_info().vmem_capacity_bytes >= 100 * 1024 * 1024
    except Exception:
        big_vmem = False
    if big_vmem and n > 256:
        tile_m = 256

    # Candidate chunk: bounded so the [TILE_N, TILE_M] working set (~a few MiB)
    # fits every generation's default scoped VMEM, independent of N.
    if tile_n is None:
        cap = 1024 if tile_m > 128 else 2048
        tile_n = n if n <= cap else cap
    assert tile_n == n or tile_n % 8 == 0, "tile_n must be a multiple of 8 or equal N"

    k_pad = 8 * ((k + 7) // 8)
    grid = (pl.cdiv(n, tile_m), pl.cdiv(n, tile_n))

    # NOTE: when n is not a multiple of tile_m, the last query tile reads
    # padded (unspecified) coordinates; those lanes produce garbage neighbor
    # columns that Pallas discards on the clipped output writeback. Padded
    # candidate rows in the last chunk are masked explicitly in the kernel.

    flops_per_step = tile_n * tile_m * 3 * dims + 3 * k * (tile_n + k_pad) * tile_m
    cost = pl.CostEstimate(
        flops=int(grid[0] * grid[1] * flops_per_step),
        transcendentals=0,
        bytes_accessed=int(4 * (grid[0] * n * dims + n * dims + k * n)),
    )

    knn_idx_t = pl.pallas_call(
        functools.partial(_knn_kernel, k=k, dims=dims, n=n,
                          tile_m=tile_m, tile_n=tile_n, idx_bits=idx_bits),
        out_shape=jax.ShapeDtypeStruct((k, n), jnp.int32),
        grid=grid,
        in_specs=[
            pl.BlockSpec((dims, tile_m), lambda i, t: (0, i)),   # query tile (transposed)
            pl.BlockSpec((tile_n, dims), lambda i, t: (t, 0)),   # candidate chunk
        ],
        out_specs=pl.BlockSpec((k, tile_m), lambda i, t: (0, i)),
        scratch_shapes=[pltpu.VMEM((k_pad, tile_m), jnp.int32)],
        compiler_params=pltpu.CompilerParams(
            dimension_semantics=("parallel", "arbitrary")),
        cost_estimate=cost,
    )(pos_t, pos_f32)

    knn_idx = knn_idx_t.T                                     # [N, k]

    # Glue: PyG-style edge_index (source = neighbor, target = center node).
    dst = jnp.repeat(jnp.arange(n, dtype=jnp.int32), k)       # [N*k]
    src = knn_idx.reshape(-1)                                 # [N*k]
    edge_index = jnp.stack([src, dst], axis=0)                # [2, N*k]
    edge_vec = pos[src] - pos[dst]                            # [N*k, D]  (exact, from pos)
    edge_dist = jnp.sqrt(jnp.sum(edge_vec * edge_vec, axis=-1))

    return {
        "pos": pos,
        "x": datapoint.get("x", None),
        "edge_index": edge_index,
        "edge_dist": edge_dist,
        "edge_vec": edge_vec,
        "num_nodes": n,
    }


if __name__ == "__main__":
    key = jax.random.PRNGKey(0)
    N, D, K = 32, 3, 19
    kpos, kfeat = jax.random.split(key)
    pos = jax.random.normal(kpos, (N, D), dtype=jnp.float32) * 3.0
    feats = jax.random.normal(kfeat, (N, 4), dtype=jnp.float32)
    datapoint = {"pos": pos, "x": feats}

    # Reference (pure JAX): direct squared differences, self excluded.
    diff = pos[:, None, :] - pos[None, :, :]
    d2 = jnp.sum(diff * diff, axis=-1)
    d2 = jnp.where(jnp.eye(N, dtype=bool), jnp.inf, d2)
    ref_idx = jnp.argsort(d2, axis=-1)[:, :K]
    ref_dist = jnp.sqrt(jnp.take_along_axis(d2, ref_idx, axis=-1))

    def check(graph):
        kernel_idx = graph["edge_index"][0].reshape(N, K)
        np.testing.assert_array_equal(np.asarray(kernel_idx), np.asarray(ref_idx))
        np.testing.assert_allclose(
            np.asarray(graph["edge_dist"].reshape(N, K)),
            np.asarray(ref_dist), rtol=1e-5, atol=1e-6)
        assert graph["edge_index"].shape == (2, N * K)
        assert graph["edge_dist"].shape == (N * K,)
        assert graph["edge_vec"].shape == (N * K, D)

    # Default path (single candidate chunk).
    graph = aperiodic_knn_graph(datapoint, k=K)
    jax.block_until_ready(graph["edge_index"])
    check(graph)

    # Forced multi-chunk path: exercises the streaming k-best merge and the
    # padded-candidate masking (32 nodes, chunks of 24 -> 2 chunks, 16 padded).
    graph2 = aperiodic_knn_graph(datapoint, k=K, tile_n=24)
    jax.block_until_ready(graph2["edge_index"])
    check(graph2)

    print("KERNEL_OK")
</pallas_src>

<mosaic_0001>
module attributes {stable_mosaic.version = 11 : i64} {
  func.func @_knn_kernel(%arg0: i32, %arg1: i32, %arg2: memref<3x32xf32, #tpu.memory_space<vmem>>, %arg3: memref<32x3xf32, #tpu.memory_space<vmem>>, %arg4: memref<19x32xi32, #tpu.memory_space<vmem>>, %arg5: memref<24x32xi32, #tpu.memory_space<vmem>>) attributes {dimension_semantics = [#tpu.dimension_semantics<parallel>, #tpu.dimension_semantics<arbitrary>], iteration_bounds = array<i64: 1, 1>, scalar_prefetch = 0 : i64, scratch_operands = 1 : i64, tpu.core_type = #tpu.core_type<tc>, window_params = [{transform_indices = @transform_0, window_bounds = array<i64: 3, 32>}, {transform_indices = @transform_1, window_bounds = array<i64: 32, 3>}, {transform_indices = @transform_2, window_bounds = array<i64: 19, 32>}]} {
    %c32_i32 = arith.constant 32 : i32
    %0 = arith.muli %arg0, %c32_i32 : i32
    %c32_i32_0 = arith.constant 32 : i32
    %1 = arith.muli %arg1, %c32_i32_0 : i32
    %c0_i32 = arith.constant 0 : i32
    %2 = arith.cmpi eq, %arg1, %c0_i32 : i32
    %3 = arith.extui %2 : i1 to i32
    %c2147483647_i32 = arith.constant 2147483647 : i32
    %c0_i32_1 = arith.constant 0 : i32
    %4 = arith.cmpi ne, %3, %c0_i32_1 : i32
    scf.if %4 {
      %366 = vector.broadcast %c2147483647_i32 : i32 to vector<24x32xi32>
      %c0_114 = arith.constant 0 : index
      %c0_115 = arith.constant 0 : index
      %367 = vector.load %arg5[%c0_114, %c0_115] : memref<24x32xi32, #tpu.memory_space<vmem>>, vector<24x32xi32>
      tpu.vector_store %arg5[%c0_114, %c0_115], %366 {strides = array<i32>} : memref<24x32xi32, #tpu.memory_space<vmem>>, vector<24x32xi32>,
    } else {
    }
    %c0 = arith.constant 0 : index
    %c0_2 = arith.constant 0 : index
    %5 = vector.load %arg2[%c0, %c0_2] : memref<3x32xf32, #tpu.memory_space<vmem>>, vector<1x32xf32>
    %c0_3 = arith.constant 0 : index
    %c0_4 = arith.constant 0 : index
    %6 = vector.load %arg3[%c0_3, %c0_4] : memref<32x3xf32, #tpu.memory_space<vmem>>, vector<32x1xf32>
    %7 = vector.broadcast %6 : vector<32x1xf32> to vector<32x32xf32>
    %8 = vector.broadcast %5 : vector<1x32xf32> to vector<32x32xf32>
    %9 = arith.subf %7, %8 : vector<32x32xf32>
    %10 = arith.mulf %9, %9 : vector<32x32xf32>
    %c1 = arith.constant 1 : index
    %c0_5 = arith.constant 0 : index
    %11 = vector.load %arg2[%c1, %c0_5] : memref<3x32xf32, #tpu.memory_space<vmem>>, vector<1x32xf32>
    %c0_6 = arith.constant 0 : index
    %c1_7 = arith.constant 1 : index
    %12 = vector.load %arg3[%c0_6, %c1_7] : memref<32x3xf32, #tpu.memory_space<vmem>>, vector<32x1xf32>
    %13 = vector.broadcast %12 : vector<32x1xf32> to vector<32x32xf32>
    %14 = vector.broadcast %11 : vector<1x32xf32> to vector<32x32xf32>
    %15 = arith.subf %13, %14 : vector<32x32xf32>
    %16 = arith.mulf %15, %15 : vector<32x32xf32>
    %17 = arith.addf %10, %16 : vector<32x32xf32>
    %c2 = arith.constant 2 : index
    %c0_8 = arith.constant 0 : index
    %18 = vector.load %arg2[%c2, %c0_8] : memref<3x32xf32, #tpu.memory_space<vmem>>, vector<1x32xf32>
    %c0_9 = arith.constant 0 : index
    %c2_10 = arith.constant 2 : index
    %19 = vector.load %arg3[%c0_9, %c2_10] : memref<32x3xf32, #tpu.memory_space<vmem>>, vector<32x1xf32>
    %20 = vector.broadcast %19 : vector<32x1xf32> to vector<32x32xf32>
    %21 = vector.broadcast %18 : vector<1x32xf32> to vector<32x32xf32>
    %22 = arith.subf %20, %21 : vector<32x32xf32>
    %23 = arith.mulf %22, %22 : vector<32x32xf32>
    %24 = arith.addf %17, %23 : vector<32x32xf32>
    %25 = tpu.iota {dimensions = array<i32: 0>} : vector<32x32xi32>
    %26 = vector.broadcast %1 : i32 to vector<32x32xi32>
    %27 = arith.addi %25, %26 : vector<32x32xi32>
    %28 = tpu.iota {dimensions = array<i32: 1>} : vector<1x32xi32>
    %29 = vector.broadcast %0 : i32 to vector<1x32xi32>
    %30 = arith.addi %28, %29 : vector<1x32xi32>
    %31 = tpu.bitcast %24 : vector<32x32xf32> -> vector<32x32xi32>
    %c-32_i32 = arith.constant -32 : i32
    %32 = vector.broadcast %c-32_i32 : i32 to vector<32x32xi32>
    %33 = arith.andi %31, %32 : vector<32x32xi32>
    %34 = arith.ori %33, %27 : vector<32x32xi32>
    %35 = vector.broadcast %30 : vector<1x32xi32> to vector<32x32xi32>
    %36 = arith.cmpi eq, %27, %35 : vector<32x32xi32>
    %c2147483647_i32_11 = arith.constant 2147483647 : i32
    %37 = vector.broadcast %c2147483647_i32_11 : i32 to vector<32x32xi32>
    %38 = arith.select %36, %37, %34 : vector<32x32xi1>, vector<32x32xi32>
    %c0_12 = arith.constant 0 : index
    %c0_13 = arith.constant 0 : index
    %39 = vector.load %arg5[%c0_12, %c0_13] : memref<24x32xi32, #tpu.memory_space<vmem>>, vector<24x32xi32>
    %c-2147483648_i32 = arith.constant -2147483648 : i32
    %40 = vector.broadcast %c-2147483648_i32 : i32 to vector<24x32xi32>
    %41 = arith.cmpi sgt, %39, %40 : vector<24x32xi32>
    %c2147483647_i32_14 = arith.constant 2147483647 : i32
    %42 = vector.broadcast %c2147483647_i32_14 : i32 to vector<24x32xi32>
    %43 = arith.select %41, %39, %42 : vector<24x32xi1>, vector<24x32xi32>
    %cst = arith.constant dense<2147483647> : vector<32xi32>
    %44 = vector.multi_reduction <minsi>, %43, %cst [0] : vector<24x32xi32> to vector<32xi32>
    %45 = vector.shape_cast %44 : vector<32xi32> to vector<1x32xi32>
    %c-2147483648_i32_15 = arith.constant -2147483648 : i32
    %46 = vector.broadcast %c-2147483648_i32_15 : i32 to vector<32x32xi32>
    %47 = arith.cmpi sgt, %38, %46 : vector<32x32xi32>
    %c2147483647_i32_16 = arith.constant 2147483647 : i32
    %48 = vector.broadcast %c2147483647_i32_16 : i32 to vector<32x32xi32>
    %49 = arith.select %47, %38, %48 : vector<32x32xi1>, vector<32x32xi32>
    %cst_17 = arith.constant dense<2147483647> : vector<32xi32>
    %50 = vector.multi_reduction <minsi>, %49, %cst_17 [0] : vector<32x32xi32> to vector<32xi32>
    %51 = vector.shape_cast %50 : vector<32xi32> to vector<1x32xi32>
    %52 = arith.minsi %45, %51 : vector<1x32xi32>
    %53 = vector.shape_cast %52 : vector<1x32xi32> to vector<32xi32>
    %c0_18 = arith.constant 0 : index
    %c0_19 = arith.constant 0 : index
    %54 = vector.load %arg5[%c0_18, %c0_19] : memref<24x32xi32, #tpu.memory_space<vmem>>, vector<1x32xi32>
    %55 = vector.shape_cast %54 : vector<1x32xi32> to vector<32xi32>
    %56 = vector.shape_cast %53 : vector<32xi32> to vector<1x32xi32>
    tpu.vector_store %arg5[%c0_18, %c0_19], %56 {strides = array<i32>} : memref<24x32xi32, #tpu.memory_space<vmem>>, vector<1x32xi32>,
    %57 = vector.broadcast %52 : vector<1x32xi32> to vector<24x32xi32>
    %58 = arith.cmpi sgt, %39, %57 : vector<24x32xi32>
    %c2147483647_i32_20 = arith.constant 2147483647 : i32
    %59 = vector.broadcast %c2147483647_i32_20 : i32 to vector<24x32xi32>
    %60 = arith.select %58, %39, %59 : vector<24x32xi1>, vector<24x32xi32>
    %cst_21 = arith.constant dense<2147483647> : vector<32xi32>
    %61 = vector.multi_reduction <minsi>, %60, %cst_21 [0] : vector<24x32xi32> to vector<32xi32>
    %62 = vector.shape_cast %61 : vector<32xi32> to vector<1x32xi32>
    %63 = vector.broadcast %52 : vector<1x32xi32> to vector<32x32xi32>
    %64 = arith.cmpi sgt, %38, %63 : vector<32x32xi32>
    %c2147483647_i32_22 = arith.constant 2147483647 : i32
    %65 = vector.broadcast %c2147483647_i32_22 : i32 to vector<32x32xi32>
    %66 = arith.select %64, %38, %65 : vector<32x32xi1>, vector<32x32xi32>
    %cst_23 = arith.constant dense<2147483647> : vector<32xi32>
    %67 = vector.multi_reduction <minsi>, %66, %cst_23 [0] : vector<32x32xi32> to vector<32xi32>
    %68 = vector.shape_cast %67 : vector<32xi32> to vector<1x32xi32>
    %69 = arith.minsi %62, %68 : vector<1x32xi32>
    %70 = vector.shape_cast %69 : vector<1x32xi32> to vector<32xi32>
    %c1_24 = arith.constant 1 : index
    %c0_25 = arith.constant 0 : index
    %71 = vector.load %arg5[%c1_24, %c0_25] : memref<24x32xi32, #tpu.memory_space<vmem>>, vector<1x32xi32>
    %72 = vector.shape_cast %71 : vector<1x32xi32> to vector<32xi32>
    %73 = vector.shape_cast %70 : vector<32xi32> to vector<1x32xi32>
    tpu.vector_store %arg5[%c1_24, %c0_25], %73 {strides = array<i32>} : memref<24x32xi32, #tpu.memory_space<vmem>>, vector<1x32xi32>,
    %74 = vector.broadcast %69 : vector<1x32xi32> to vector<24x32xi32>
    %75 = arith.cmpi sgt, %39, %74 : vector<24x32xi32>
    %c2147483647_i32_26 = arith.constant 2147483647 : i32
    %76 = vector.broadcast %c2147483647_i32_26 : i32 to vector<24x32xi32>
    %77 = arith.select %75, %39, %76 : vector<24x32xi1>, vector<24x32xi32>
    %cst_27 = arith.constant dense<2147483647> : vector<32xi32>
    %78 = vector.multi_reduction <minsi>, %77, %cst_27 [0] : vector<24x32xi32> to vector<32xi32>
    %79 = vector.shape_cast %78 : vector<32xi32> to vector<1x32xi32>
    %80 = vector.broadcast %69 : vector<1x32xi32> to vector<32x32xi32>
    %81 = arith.cmpi sgt, %38, %80 : vector<32x32xi32>
    %c2147483647_i32_28 = arith.constant 2147483647 : i32
    %82 = vector.broadcast %c2147483647_i32_28 : i32 to vector<32x32xi32>
    %83 = arith.select %81, %38, %82 : vector<32x32xi1>, vector<32x32xi32>
    %cst_29 = arith.constant dense<2147483647> : vector<32xi32>
    %84 = vector.multi_reduction <minsi>, %83, %cst_29 [0] : vector<32x32xi32> to vector<32xi32>
    %85 = vector.shape_cast %84 : vector<32xi32> to vector<1x32xi32>
    %86 = arith.minsi %79, %85 : vector<1x32xi32>
    %87 = vector.shape_cast %86 : vector<1x32xi32> to vector<32xi32>
    %c2_30 = arith.constant 2 : index
    %c0_31 = arith.constant 0 : index
    %88 = vector.load %arg5[%c2_30, %c0_31] : memref<24x32xi32, #tpu.memory_space<vmem>>, vector<1x32xi32>
    %89 = vector.shape_cast %88 : vector<1x32xi32> to vector<32xi32>
    %90 = vector.shape_cast %87 : vector<32xi32> to vector<1x32xi32>
    tpu.vector_store %arg5[%c2_30, %c0_31], %90 {strides = array<i32>} : memref<24x32xi32, #tpu.memory_space<vmem>>, vector<1x32xi32>,
    %91 = vector.broadcast %86 : vector<1x32xi32> to vector<24x32xi32>
    %92 = arith.cmpi sgt, %39, %91 : vector<24x32xi32>
    %c2147483647_i32_32 = arith.constant 2147483647 : i32
    %93 = vector.broadcast %c2147483647_i32_32 : i32 to vector<24x32xi32>
    %94 = arith.select %92, %39, %93 : vector<24x32xi1>, vector<24x32xi32>
    %cst_33 = arith.constant dense<2147483647> : vector<32xi32>
    %95 = vector.multi_reduction <minsi>, %94, %cst_33 [0] : vector<24x32xi32> to vector<32xi32>
    %96 = vector.shape_cast %95 : vector<32xi32> to vector<1x32xi32>
    %97 = vector.broadcast %86 : vector<1x32xi32> to vector<32x32xi32>
    %98 = arith.cmpi sgt, %38, %97 : vector<32x32xi32>
    %c2147483647_i32_34 = arith.constant 2147483647 : i32
    %99 = vector.broadcast %c2147483647_i32_34 : i32 to vector<32x32xi32>
    %100 = arith.select %98, %38, %99 : vector<32x32xi1>, vector<32x32xi32>
    %cst_35 = arith.constant dense<2147483647> : vector<32xi32>
    %101 = vector.multi_reduction <minsi>, %100, %cst_35 [0] : vector<32x32xi32> to vector<32xi32>
    %102 = vector.shape_cast %101 : vector<32xi32> to vector<1x32xi32>
    %103 = arith.minsi %96, %102 : vector<1x32xi32>
    %104 = vector.shape_cast %103 : vector<1x32xi32> to vector<32xi32>
    %c3 = arith.constant 3 : index
    %c0_36 = arith.constant 0 : index
    %105 = vector.load %arg5[%c3, %c0_36] : memref<24x32xi32, #tpu.memory_space<vmem>>, vector<1x32xi32>
    %106 = vector.shape_cast %105 : vector<1x32xi32> to vector<32xi32>
    %107 = vector.shape_cast %104 : vector<32xi32> to vector<1x32xi32>
    tpu.vector_store %arg5[%c3, %c0_36], %107 {strides = array<i32>} : memref<24x32xi32, #tpu.memory_space<vmem>>, vector<1x32xi32>,
    %108 = vector.broadcast %103 : vector<1x32xi32> to vector<24x32xi32>
    %109 = arith.cmpi sgt, %39, %108 : vector<24x32xi32>
    %c2147483647_i32_37 = arith.constant 2147483647 : i32
    %110 = vector.broadcast %c2147483647_i32_37 : i32 to vector<24x32xi32>
    %111 = arith.select %109, %39, %110 : vector<24x32xi1>, vector<24x32xi32>
    %cst_38 = arith.constant dense<2147483647> : vector<32xi32>
    %112 = vector.multi_reduction <minsi>, %111, %cst_38 [0] : vector<24x32xi32> to vector<32xi32>
    %113 = vector.shape_cast %112 : vector<32xi32> to vector<1x32xi32>
    %114 = vector.broadcast %103 : vector<1x32xi32> to vector<32x32xi32>
    %115 = arith.cmpi sgt, %38, %114 : vector<32x32xi32>
    %c2147483647_i32_39 = arith.constant 2147483647 : i32
    %116 = vector.broadcast %c2147483647_i32_39 : i32 to vector<32x32xi32>
    %117 = arith.select %115, %38, %116 : vector<32x32xi1>, vector<32x32xi32>
    %cst_40 = arith.constant dense<2147483647> : vector<32xi32>
    %118 = vector.multi_reduction <minsi>, %117, %cst_40 [0] : vector<32x32xi32> to vector<32xi32>
    %119 = vector.shape_cast %118 : vector<32xi32> to vector<1x32xi32>
    %120 = arith.minsi %113, %119 : vector<1x32xi32>
    %121 = vector.shape_cast %120 : vector<1x32xi32> to vector<32xi32>
    %c4 = arith.constant 4 : index
    %c0_41 = arith.constant 0 : index
    %122 = vector.load %arg5[%c4, %c0_41] : memref<24x32xi32, #tpu.memory_space<vmem>>, vector<1x32xi32>
    %123 = vector.shape_cast %122 : vector<1x32xi32> to vector<32xi32>
    %124 = vector.shape_cast %121 : vector<32xi32> to vector<1x32xi32>
    tpu.vector_store %arg5[%c4, %c0_41], %124 {strides = array<i32>} : memref<24x32xi32, #tpu.memory_space<vmem>>, vector<1x32xi32>,
    %125 = vector.broadcast %120 : vector<1x32xi32> to vector<24x32xi32>
    %126 = arith.cmpi sgt, %39, %125 : vector<24x32xi32>
    %c2147483647_i32_42 = arith.constant 2147483647 : i32
    %127 = vector.broadcast %c2147483647_i32_42 : i32 to vector<24x32xi32>
    %128 = arith.select %126, %39, %127 : vector<24x32xi1>, vector<24x32xi32>
    %cst_43 = arith.constant dense<2147483647> : vector<32xi32>
    %129 = vector.multi_reduction <minsi>, %128, %cst_43 [0] : vector<24x32xi32> to vector<32xi32>
    %130 = vector.shape_cast %129 : vector<32xi32> to vector<1x32xi32>
    %131 = vector.broadcast %120 : vector<1x32xi32> to vector<32x32xi32>
    %132 = arith.cmpi sgt, %38, %131 : vector<32x32xi32>
    %c2147483647_i32_44 = arith.constant 2147483647 : i32
    %133 = vector.broadcast %c2147483647_i32_44 : i32 to vector<32x32xi32>
    %134 = arith.select %132, %38, %133 : vector<32x32xi1>, vector<32x32xi32>
    %cst_45 = arith.constant dense<2147483647> : vector<32xi32>
    %135 = vector.multi_reduction <minsi>, %134, %cst_45 [0] : vector<32x32xi32> to vector<32xi32>
    %136 = vector.shape_cast %135 : vector<32xi32> to vector<1x32xi32>
    %137 = arith.minsi %130, %136 : vector<1x32xi32>
    %138 = vector.shape_cast %137 : vector<1x32xi32> to vector<32xi32>
    %c5 = arith.constant 5 : index
    %c0_46 = arith.constant 0 : index
    %139 = vector.load %arg5[%c5, %c0_46] : memref<24x32xi32, #tpu.memory_space<vmem>>, vector<1x32xi32>
    %140 = vector.shape_cast %139 : vector<1x32xi32> to vector<32xi32>
    %141 = vector.shape_cast %138 : vector<32xi32> to vector<1x32xi32>
    tpu.vector_store %arg5[%c5, %c0_46], %141 {strides = array<i32>} : memref<24x32xi32, #tpu.memory_space<vmem>>, vector<1x32xi32>,
    %142 = vector.broadcast %137 : vector<1x32xi32> to vector<24x32xi32>
    %143 = arith.cmpi sgt, %39, %142 : vector<24x32xi32>
    %c2147483647_i32_47 = arith.constant 2147483647 : i32
    %144 = vector.broadcast %c2147483647_i32_47 : i32 to vector<24x32xi32>
    %145 = arith.select %143, %39, %144 : vector<24x32xi1>, vector<24x32xi32>
    %cst_48 = arith.constant dense<2147483647> : vector<32xi32>
    %146 = vector.multi_reduction <minsi>, %145, %cst_48 [0] : vector<24x32xi32> to vector<32xi32>
    %147 = vector.shape_cast %146 : vector<32xi32> to vector<1x32xi32>
    %148 = vector.broadcast %137 : vector<1x32xi32> to vector<32x32xi32>
    %149 = arith.cmpi sgt, %38, %148 : vector<32x32xi32>
    %c2147483647_i32_49 = arith.constant 2147483647 : i32
    %150 = vector.broadcast %c2147483647_i32_49 : i32 to vector<32x32xi32>
    %151 = arith.select %149, %38, %150 : vector<32x32xi1>, vector<32x32xi32>
    %cst_50 = arith.constant dense<2147483647> : vector<32xi32>
    %152 = vector.multi_reduction <minsi>, %151, %cst_50 [0] : vector<32x32xi32> to vector<32xi32>
    %153 = vector.shape_cast %152 : vector<32xi32> to vector<1x32xi32>
    %154 = arith.minsi %147, %153 : vector<1x32xi32>
    %155 = vector.shape_cast %154 : vector<1x32xi32> to vector<32xi32>
    %c6 = arith.constant 6 : index
    %c0_51 = arith.constant 0 : index
    %156 = vector.load %arg5[%c6, %c0_51] : memref<24x32xi32, #tpu.memory_space<vmem>>, vector<1x32xi32>
    %157 = vector.shape_cast %156 : vector<1x32xi32> to vector<32xi32>
    %158 = vector.shape_cast %155 : vector<32xi32> to vector<1x32xi32>
    tpu.vector_store %arg5[%c6, %c0_51], %158 {strides = array<i32>} : memref<24x32xi32, #tpu.memory_space<vmem>>, vector<1x32xi32>,
    %159 = vector.broadcast %154 : vector<1x32xi32> to vector<24x32xi32>
    %160 = arith.cmpi sgt, %39, %159 : vector<24x32xi32>
    %c2147483647_i32_52 = arith.constant 2147483647 : i32
    %161 = vector.broadcast %c2147483647_i32_52 : i32 to vector<24x32xi32>
    %162 = arith.select %160, %39, %161 : vector<24x32xi1>, vector<24x32xi32>
    %cst_53 = arith.constant dense<2147483647> : vector<32xi32>
    %163 = vector.multi_reduction <minsi>, %162, %cst_53 [0] : vector<24x32xi32> to vector<32xi32>
    %164 = vector.shape_cast %163 : vector<32xi32> to vector<1x32xi32>
    %165 = vector.broadcast %154 : vector<1x32xi32> to vector<32x32xi32>
    %166 = arith.cmpi sgt, %38, %165 : vector<32x32xi32>
    %c2147483647_i32_54 = arith.constant 2147483647 : i32
    %167 = vector.broadcast %c2147483647_i32_54 : i32 to vector<32x32xi32>
    %168 = arith.select %166, %38, %167 : vector<32x32xi1>, vector<32x32xi32>
    %cst_55 = arith.constant dense<2147483647> : vector<32xi32>
    %169 = vector.multi_reduction <minsi>, %168, %cst_55 [0] : vector<32x32xi32> to vector<32xi32>
    %170 = vector.shape_cast %169 : vector<32xi32> to vector<1x32xi32>
    %171 = arith.minsi %164, %170 : vector<1x32xi32>
    %172 = vector.shape_cast %171 : vector<1x32xi32> to vector<32xi32>
    %c7 = arith.constant 7 : index
    %c0_56 = arith.constant 0 : index
    %173 = vector.load %arg5[%c7, %c0_56] : memref<24x32xi32, #tpu.memory_space<vmem>>, vector<1x32xi32>
    %174 = vector.shape_cast %173 : vector<1x32xi32> to vector<32xi32>
    %175 = vector.shape_cast %172 : vector<32xi32> to vector<1x32xi32>
    tpu.vector_store %arg5[%c7, %c0_56], %175 {strides = array<i32>} : memref<24x32xi32, #tpu.memory_space<vmem>>, vector<1x32xi32>,
    %176 = vector.broadcast %171 : vector<1x32xi32> to vector<24x32xi32>
    %177 = arith.cmpi sgt, %39, %176 : vector<24x32xi32>
    %c2147483647_i32_57 = arith.constant 2147483647 : i32
    %178 = vector.broadcast %c2147483647_i32_57 : i32 to vector<24x32xi32>
    %179 = arith.select %177, %39, %178 : vector<24x32xi1>, vector<24x32xi32>
    %cst_58 = arith.constant dense<2147483647> : vector<32xi32>
    %180 = vector.multi_reduction <minsi>, %179, %cst_58 [0] : vector<24x32xi32> to vector<32xi32>
    %181 = vector.shape_cast %180 : vector<32xi32> to vector<1x32xi32>
    %182 = vector.broadcast %171 : vector<1x32xi32> to vector<32x32xi32>
    %183 = arith.cmpi sgt, %38, %182 : vector<32x32xi32>
    %c2147483647_i32_59 = arith.constant 2147483647 : i32
    %184 = vector.broadcast %c2147483647_i32_59 : i32 to vector<32x32xi32>
    %185 = arith.select %183, %38, %184 : vector<32x32xi1>, vector<32x32xi32>
    %cst_60 = arith.constant dense<2147483647> : vector<32xi32>
    %186 = vector.multi_reduction <minsi>, %185, %cst_60 [0] : vector<32x32xi32> to vector<32xi32>
    %187 = vector.shape_cast %186 : vector<32xi32> to vector<1x32xi32>
    %188 = arith.minsi %181, %187 : vector<1x32xi32>
    %189 = vector.shape_cast %188 : vector<1x32xi32> to vector<32xi32>
    %c8 = arith.constant 8 : index
    %c0_61 = arith.constant 0 : index
    %190 = vector.load %arg5[%c8, %c0_61] : memref<24x32xi32, #tpu.memory_space<vmem>>, vector<1x32xi32>
    %191 = vector.shape_cast %190 : vector<1x32xi32> to vector<32xi32>
    %192 = vector.shape_cast %189 : vector<32xi32> to vector<1x32xi32>
    tpu.vector_store %arg5[%c8, %c0_61], %192 {strides = array<i32>} : memref<24x32xi32, #tpu.memory_space<vmem>>, vector<1x32xi32>,
    %193 = vector.broadcast %188 : vector<1x32xi32> to vector<24x32xi32>
    %194 = arith.cmpi sgt, %39, %193 : vector<24x32xi32>
    %c2147483647_i32_62 = arith.constant 2147483647 : i32
    %195 = vector.broadcast %c2147483647_i32_62 : i32 to vector<24x32xi32>
    %196 = arith.select %194, %39, %195 : vector<24x32xi1>, vector<24x32xi32>
    %cst_63 = arith.constant dense<2147483647> : vector<32xi32>
    %197 = vector.multi_reduction <minsi>, %196, %cst_63 [0] : vector<24x32xi32> to vector<32xi32>
    %198 = vector.shape_cast %197 : vector<32xi32> to vector<1x32xi32>
    %199 = vector.broadcast %188 : vector<1x32xi32> to vector<32x32xi32>
    %200 = arith.cmpi sgt, %38, %199 : vector<32x32xi32>
    %c2147483647_i32_64 = arith.constant 2147483647 : i32
    %201 = vector.broadcast %c2147483647_i32_64 : i32 to vector<32x32xi32>
    %202 = arith.select %200, %38, %201 : vector<32x32xi1>, vector<32x32xi32>
    %cst_65 = arith.constant dense<2147483647> : vector<32xi32>
    %203 = vector.multi_reduction <minsi>, %202, %cst_65 [0] : vector<32x32xi32> to vector<32xi32>
    %204 = vector.shape_cast %203 : vector<32xi32> to vector<1x32xi32>
    %205 = arith.minsi %198, %204 : vector<1x32xi32>
    %206 = vector.shape_cast %205 : vector<1x32xi32> to vector<32xi32>
    %c9 = arith.constant 9 : index
    %c0_66 = arith.constant 0 : index
    %207 = vector.load %arg5[%c9, %c0_66] : memref<24x32xi32, #tpu.memory_space<vmem>>, vector<1x32xi32>
    %208 = vector.shape_cast %207 : vector<1x32xi32> to vector<32xi32>
    %209 = vector.shape_cast %206 : vector<32xi32> to vector<1x32xi32>
    tpu.vector_store %arg5[%c9, %c0_66], %209 {strides = array<i32>} : memref<24x32xi32, #tpu.memory_space<vmem>>, vector<1x32xi32>,
    %210 = vector.broadcast %205 : vector<1x32xi32> to vector<24x32xi32>
    %211 = arith.cmpi sgt, %39, %210 : vector<24x32xi32>
    %c2147483647_i32_67 = arith.constant 2147483647 : i32
    %212 = vector.broadcast %c2147483647_i32_67 : i32 to vector<24x32xi32>
    %213 = arith.select %211, %39, %212 : vector<24x32xi1>, vector<24x32xi32>
    %cst_68 = arith.constant dense<2147483647> : vector<32xi32>
    %214 = vector.multi_reduction <minsi>, %213, %cst_68 [0] : vector<24x32xi32> to vector<32xi32>
    %215 = vector.shape_cast %214 : vector<32xi32> to vector<1x32xi32>
    %216 = vector.broadcast %205 : vector<1x32xi32> to vector<32x32xi32>
    %217 = arith.cmpi sgt, %38, %216 : vector<32x32xi32>
    %c2147483647_i32_69 = arith.constant 2147483647 : i32
    %218 = vector.broadcast %c2147483647_i32_69 : i32 to vector<32x32xi32>
    %219 = arith.select %217, %38, %218 : vector<32x32xi1>, vector<32x32xi32>
    %cst_70 = arith.constant dense<2147483647> : vector<32xi32>
    %220 = vector.multi_reduction <minsi>, %219, %cst_70 [0] : vector<32x32xi32> to vector<32xi32>
    %221 = vector.shape_cast %220 : vector<32xi32> to vector<1x32xi32>
    %222 = arith.minsi %215, %221 : vector<1x32xi32>
    %223 = vector.shape_cast %222 : vector<1x32xi32> to vector<32xi32>
    %c10 = arith.constant 10 : index
    %c0_71 = arith.constant 0 : index
    %224 = vector.load %arg5[%c10, %c0_71] : memref<24x32xi32, #tpu.memory_space<vmem>>, vector<1x32xi32>
    %225 = vector.shape_cast %224 : vector<1x32xi32> to vector<32xi32>
    %226 = vector.shape_cast %223 : vector<32xi32> to vector<1x32xi32>
    tpu.vector_store %arg5[%c10, %c0_71], %226 {strides = array<i32>} : memref<24x32xi32, #tpu.memory_space<vmem>>, vector<1x32xi32>,
    %227 = vector.broadcast %222 : vector<1x32xi32> to vector<24x32xi32>
    %228 = arith.cmpi sgt, %39, %227 : vector<24x32xi32>
    %c2147483647_i32_72 = arith.constant 2147483647 : i32
    %229 = vector.broadcast %c2147483647_i32_72 : i32 to vector<24x32xi32>
    %230 = arith.select %228, %39, %229 : vector<24x32xi1>, vector<24x32xi32>
    %cst_73 = arith.constant dense<2147483647> : vector<32xi32>
    %231 = vector.multi_reduction <minsi>, %230, %cst_73 [0] : vector<24x32xi32> to vector<32xi32>
    %232 = vector.shape_cast %231 : vector<32xi32> to vector<1x32xi32>
    %233 = vector.broadcast %222 : vector<1x32xi32> to vector<32x32xi32>
    %234 = arith.cmpi sgt, %38, %233 : vector<32x32xi32>
    %c2147483647_i32_74 = arith.constant 2147483647 : i32
    %235 = vector.broadcast %c2147483647_i32_74 : i32 to vector<32x32xi32>
    %236 = arith.select %234, %38, %235 : vector<32x32xi1>, vector<32x32xi32>
    %cst_75 = arith.constant dense<2147483647> : vector<32xi32>
    %237 = vector.multi_reduction <minsi>, %236, %cst_75 [0] : vector<32x32xi32> to vector<32xi32>
    %238 = vector.shape_cast %237 : vector<32xi32> to vector<1x32xi32>
    %239 = arith.minsi %232, %238 : vector<1x32xi32>
    %240 = vector.shape_cast %239 : vector<1x32xi32> to vector<32xi32>
    %c11 = arith.constant 11 : index
    %c0_76 = arith.constant 0 : index
    %241 = vector.load %arg5[%c11, %c0_76] : memref<24x32xi32, #tpu.memory_space<vmem>>, vector<1x32xi32>
    %242 = vector.shape_cast %241 : vector<1x32xi32> to vector<32xi32>
    %243 = vector.shape_cast %240 : vector<32xi32> to vector<1x32xi32>
    tpu.vector_store %arg5[%c11, %c0_76], %243 {strides = array<i32>} : memref<24x32xi32, #tpu.memory_space<vmem>>, vector<1x32xi32>,
    %244 = vector.broadcast %239 : vector<1x32xi32> to vector<24x32xi32>
    %245 = arith.cmpi sgt, %39, %244 : vector<24x32xi32>
    %c2147483647_i32_77 = arith.constant 2147483647 : i32
    %246 = vector.broadcast %c2147483647_i32_77 : i32 to vector<24x32xi32>
    %247 = arith.select %245, %39, %246 : vector<24x32xi1>, vector<24x32xi32>
    %cst_78 = arith.constant dense<2147483647> : vector<32xi32>
    %248 = vector.multi_reduction <minsi>, %247, %cst_78 [0] : vector<24x32xi32> to vector<32xi32>
    %249 = vector.shape_cast %248 : vector<32xi32> to vector<1x32xi32>
    %250 = vector.broadcast %239 : vector<1x32xi32> to vector<32x32xi32>
    %251 = arith.cmpi sgt, %38, %250 : vector<32x32xi32>
    %c2147483647_i32_79 = arith.constant 2147483647 : i32
    %252 = vector.broadcast %c2147483647_i32_79 : i32 to vector<32x32xi32>
    %253 = arith.select %251, %38, %252 : vector<32x32xi1>, vector<32x32xi32>
    %cst_80 = arith.constant dense<2147483647> : vector<32xi32>
    %254 = vector.multi_reduction <minsi>, %253, %cst_80 [0] : vector<32x32xi32> to vector<32xi32>
    %255 = vector.shape_cast %254 : vector<32xi32> to vector<1x32xi32>
    %256 = arith.minsi %249, %255 : vector<1x32xi32>
    %257 = vector.shape_cast %256 : vector<1x32xi32> to vector<32xi32>
    %c12 = arith.constant 12 : index
    %c0_81 = arith.constant 0 : index
    %258 = vector.load %arg5[%c12, %c0_81] : memref<24x32xi32, #tpu.memory_space<vmem>>, vector<1x32xi32>
    %259 = vector.shape_cast %258 : vector<1x32xi32> to vector<32xi32>
    %260 = vector.shape_cast %257 : vector<32xi32> to vector<1x32xi32>
    tpu.vector_store %arg5[%c12, %c0_81], %260 {strides = array<i32>} : memref<24x32xi32, #tpu.memory_space<vmem>>, vector<1x32xi32>,
    %261 = vector.broadcast %256 : vector<1x32xi32> to vector<24x32xi32>
    %262 = arith.cmpi sgt, %39, %261 : vector<24x32xi32>
    %c2147483647_i32_82 = arith.constant 2147483647 : i32
    %263 = vector.broadcast %c2147483647_i32_82 : i32 to vector<24x32xi32>
    %264 = arith.select %262, %39, %263 : vector<24x32xi1>, vector<24x32xi32>
    %cst_83 = arith.constant dense<2147483647> : vector<32xi32>
    %265 = vector.multi_reduction <minsi>, %264, %cst_83 [0] : vector<24x32xi32> to vector<32xi32>
    %266 = vector.shape_cast %265 : vector<32xi32> to vector<1x32xi32>
    %267 = vector.broadcast %256 : vector<1x32xi32> to vector<32x32xi32>
    %268 = arith.cmpi sgt, %38, %267 : vector<32x32xi32>
    %c2147483647_i32_84 = arith.constant 2147483647 : i32
    %269 = vector.broadcast %c2147483647_i32_84 : i32 to vector<32x32xi32>
    %270 = arith.select %268, %38, %269 : vector<32x32xi1>, vector<32x32xi32>
    %cst_85 = arith.constant dense<2147483647> : vector<32xi32>
    %271 = vector.multi_reduction <minsi>, %270, %cst_85 [0] : vector<32x32xi32> to vector<32xi32>
    %272 = vector.shape_cast %271 : vector<32xi32> to vector<1x32xi32>
    %273 = arith.minsi %266, %272 : vector<1x32xi32>
    %274 = vector.shape_cast %273 : vector<1x32xi32> to vector<32xi32>
    %c13 = arith.constant 13 : index
    %c0_86 = arith.constant 0 : index
    %275 = vector.load %arg5[%c13, %c0_86] : memref<24x32xi32, #tpu.memory_space<vmem>>, vector<1x32xi32>
    %276 = vector.shape_cast %275 : vector<1x32xi32> to vector<32xi32>
    %277 = vector.shape_cast %274 : vector<32xi32> to vector<1x32xi32>
    tpu.vector_store %arg5[%c13, %c0_86], %277 {strides = array<i32>} : memref<24x32xi32, #tpu.memory_space<vmem>>, vector<1x32xi32>,
    %278 = vector.broadcast %273 : vector<1x32xi32> to vector<24x32xi32>
    %279 = arith.cmpi sgt, %39, %278 : vector<24x32xi32>
    %c2147483647_i32_87 = arith.constant 2147483647 : i32
    %280 = vector.broadcast %c2147483647_i32_87 : i32 to vector<24x32xi32>
    %281 = arith.select %279, %39, %280 : vector<24x32xi1>, vector<24x32xi32>
    %cst_88 = arith.constant dense<2147483647> : vector<32xi32>
    %282 = vector.multi_reduction <minsi>, %281, %cst_88 [0] : vector<24x32xi32> to vector<32xi32>
    %283 = vector.shape_cast %282 : vector<32xi32> to vector<1x32xi32>
    %284 = vector.broadcast %273 : vector<1x32xi32> to vector<32x32xi32>
    %285 = arith.cmpi sgt, %38, %284 : vector<32x32xi32>
    %c2147483647_i32_89 = arith.constant 2147483647 : i32
    %286 = vector.broadcast %c2147483647_i32_89 : i32 to vector<32x32xi32>
    %287 = arith.select %285, %38, %286 : vector<32x32xi1>, vector<32x32xi32>
    %cst_90 = arith.constant dense<2147483647> : vector<32xi32>
    %288 = vector.multi_reduction <minsi>, %287, %cst_90 [0] : vector<32x32xi32> to vector<32xi32>
    %289 = vector.shape_cast %288 : vector<32xi32> to vector<1x32xi32>
    %290 = arith.minsi %283, %289 : vector<1x32xi32>
    %291 = vector.shape_cast %290 : vector<1x32xi32> to vector<32xi32>
    %c14 = arith.constant 14 : index
    %c0_91 = arith.constant 0 : index
    %292 = vector.load %arg5[%c14, %c0_91] : memref<24x32xi32, #tpu.memory_space<vmem>>, vector<1x32xi32>
    %293 = vector.shape_cast %292 : vector<1x32xi32> to vector<32xi32>
    %294 = vector.shape_cast %291 : vector<32xi32> to vector<1x32xi32>
    tpu.vector_store %arg5[%c14, %c0_91], %294 {strides = array<i32>} : memref<24x32xi32, #tpu.memory_space<vmem>>, vector<1x32xi32>,
    %295 = vector.broadcast %290 : vector<1x32xi32> to vector<24x32xi32>
    %296 = arith.cmpi sgt, %39, %295 : vector<24x32xi32>
    %c2147483647_i32_92 = arith.constant 2147483647 : i32
    %297 = vector.broadcast %c2147483647_i32_92 : i32 to vector<24x32xi32>
    %298 = arith.select %296, %39, %297 : vector<24x32xi1>, vector<24x32xi32>
    %cst_93 = arith.constant dense<2147483647> : vector<32xi32>
    %299 = vector.multi_reduction <minsi>, %298, %cst_93 [0] : vector<24x32xi32> to vector<32xi32>
    %300 = vector.shape_cast %299 : vector<32xi32> to vector<1x32xi32>
    %301 = vector.broadcast %290 : vector<1x32xi32> to vector<32x32xi32>
    %302 = arith.cmpi sgt, %38, %301 : vector<32x32xi32>
    %c2147483647_i32_94 = arith.constant 2147483647 : i32
    %303 = vector.broadcast %c2147483647_i32_94 : i32 to vector<32x32xi32>
    %304 = arith.select %302, %38, %303 : vector<32x32xi1>, vector<32x32xi32>
    %cst_95 = arith.constant dense<2147483647> : vector<32xi32>
    %305 = vector.multi_reduction <minsi>, %304, %cst_95 [0] : vector<32x32xi32> to vector<32xi32>
    %306 = vector.shape_cast %305 : vector<32xi32> to vector<1x32xi32>
    %307 = arith.minsi %300, %306 : vector<1x32xi32>
    %308 = vector.shape_cast %307 : vector<1x32xi32> to vector<32xi32>
    %c15 = arith.constant 15 : index
    %c0_96 = arith.constant 0 : index
    %309 = vector.load %arg5[%c15, %c0_96] : memref<24x32xi32, #tpu.memory_space<vmem>>, vector<1x32xi32>
    %310 = vector.shape_cast %309 : vector<1x32xi32> to vector<32xi32>
    %311 = vector.shape_cast %308 : vector<32xi32> to vector<1x32xi32>
    tpu.vector_store %arg5[%c15, %c0_96], %311 {strides = array<i32>} : memref<24x32xi32, #tpu.memory_space<vmem>>, vector<1x32xi32>,
    %312 = vector.broadcast %307 : vector<1x32xi32> to vector<24x32xi32>
    %313 = arith.cmpi sgt, %39, %312 : vector<24x32xi32>
    %c2147483647_i32_97 = arith.constant 2147483647 : i32
    %314 = vector.broadcast %c2147483647_i32_97 : i32 to vector<24x32xi32>
    %315 = arith.select %313, %39, %314 : vector<24x32xi1>, vector<24x32xi32>
    %cst_98 = arith.constant dense<2147483647> : vector<32xi32>
    %316 = vector.multi_reduction <minsi>, %315, %cst_98 [0] : vector<24x32xi32> to vector<32xi32>
    %317 = vector.shape_cast %316 : vector<32xi32> to vector<1x32xi32>
    %318 = vector.broadcast %307 : vector<1x32xi32> to vector<32x32xi32>
    %319 = arith.cmpi sgt, %38, %318 : vector<32x32xi32>
    %c2147483647_i32_99 = arith.constant 2147483647 : i32
    %320 = vector.broadcast %c2147483647_i32_99 : i32 to vector<32x32xi32>
    %321 = arith.select %319, %38, %320 : vector<32x32xi1>, vector<32x32xi32>
    %cst_100 = arith.constant dense<2147483647> : vector<32xi32>
    %322 = vector.multi_reduction <minsi>, %321, %cst_100 [0] : vector<32x32xi32> to vector<32xi32>
    %323 = vector.shape_cast %322 : vector<32xi32> to vector<1x32xi32>
    %324 = arith.minsi %317, %323 : vector<1x32xi32>
    %325 = vector.shape_cast %324 : vector<1x32xi32> to vector<32xi32>
    %c16 = arith.constant 16 : index
    %c0_101 = arith.constant 0 : index
    %326 = vector.load %arg5[%c16, %c0_101] : memref<24x32xi32, #tpu.memory_space<vmem>>, vector<1x32xi32>
    %327 = vector.shape_cast %326 : vector<1x32xi32> to vector<32xi32>
    %328 = vector.shape_cast %325 : vector<32xi32> to vector<1x32xi32>
    tpu.vector_store %arg5[%c16, %c0_101], %328 {strides = array<i32>} : memref<24x32xi32, #tpu.memory_space<vmem>>, vector<1x32xi32>,
    %329 = vector.broadcast %324 : vector<1x32xi32> to vector<24x32xi32>
    %330 = arith.cmpi sgt, %39, %329 : vector<24x32xi32>
    %c2147483647_i32_102 = arith.constant 2147483647 : i32
    %331 = vector.broadcast %c2147483647_i32_102 : i32 to vector<24x32xi32>
    %332 = arith.select %330, %39, %331 : vector<24x32xi1>, vector<24x32xi32>
    %cst_103 = arith.constant dense<2147483647> : vector<32xi32>
    %333 = vector.multi_reduction <minsi>, %332, %cst_103 [0] : vector<24x32xi32> to vector<32xi32>
    %334 = vector.shape_cast %333 : vector<32xi32> to vector<1x32xi32>
    %335 = vector.broadcast %324 : vector<1x32xi32> to vector<32x32xi32>
    %336 = arith.cmpi sgt, %38, %335 : vector<32x32xi32>
    %c2147483647_i32_104 = arith.constant 2147483647 : i32
    %337 = vector.broadcast %c2147483647_i32_104 : i32 to vector<32x32xi32>
    %338 = arith.select %336, %38, %337 : vector<32x32xi1>, vector<32x32xi32>
    %cst_105 = arith.constant dense<2147483647> : vector<32xi32>
    %339 = vector.multi_reduction <minsi>, %338, %cst_105 [0] : vector<32x32xi32> to vector<32xi32>
    %340 = vector.shape_cast %339 : vector<32xi32> to vector<1x32xi32>
    %341 = arith.minsi %334, %340 : vector<1x32xi32>
    %342 = vector.shape_cast %341 : vector<1x32xi32> to vector<32xi32>
    %c17 = arith.constant 17 : index
    %c0_106 = arith.constant 0 : index
    %343 = vector.load %arg5[%c17, %c0_106] : memref<24x32xi32, #tpu.memory_space<vmem>>, vector<1x32xi32>
    %344 = vector.shape_cast %343 : vector<1x32xi32> to vector<32xi32>
    %345 = vector.shape_cast %342 : vector<32xi32> to vector<1x32xi32>
    tpu.vector_store %arg5[%c17, %c0_106], %345 {strides = array<i32>} : memref<24x32xi32, #tpu.memory_space<vmem>>, vector<1x32xi32>,
    %346 = vector.broadcast %341 : vector<1x32xi32> to vector<24x32xi32>
    %347 = arith.cmpi sgt, %39, %346 : vector<24x32xi32>
    %c2147483647_i32_107 = arith.constant 2147483647 : i32
    %348 = vector.broadcast %c2147483647_i32_107 : i32 to vector<24x32xi32>
    %349 = arith.select %347, %39, %348 : vector<24x32xi1>, vector<24x32xi32>
    %cst_108 = arith.constant dense<2147483647> : vector<32xi32>
    %350 = vector.multi_reduction <minsi>, %349, %cst_108 [0] : vector<24x32xi32> to vector<32xi32>
    %351 = vector.shape_cast %350 : vector<32xi32> to vector<1x32xi32>
    %352 = vector.broadcast %341 : vector<1x32xi32> to vector<32x32xi32>
    %353 = arith.cmpi sgt, %38, %352 : vector<32x32xi32>
    %c2147483647_i32_109 = arith.constant 2147483647 : i32
    %354 = vector.broadcast %c2147483647_i32_109 : i32 to vector<32x32xi32>
    %355 = arith.select %353, %38, %354 : vector<32x32xi1>, vector<32x32xi32>
    %cst_110 = arith.constant dense<2147483647> : vector<32xi32>
    %356 = vector.multi_reduction <minsi>, %355, %cst_110 [0] : vector<32x32xi32> to vector<32xi32>
    %357 = vector.shape_cast %356 : vector<32xi32> to vector<1x32xi32>
    %358 = arith.minsi %351, %357 : vector<1x32xi32>
    %359 = vector.shape_cast %358 : vector<1x32xi32> to vector<32xi32>
    %c18 = arith.constant 18 : index
    %c0_111 = arith.constant 0 : index
    %360 = vector.load %arg5[%c18, %c0_111] : memref<24x32xi32, #tpu.memory_space<vmem>>, vector<1x32xi32>
    %361 = vector.shape_cast %360 : vector<1x32xi32> to vector<32xi32>
    %362 = vector.shape_cast %359 : vector<32xi32> to vector<1x32xi32>
    tpu.vector_store %arg5[%c18, %c0_111], %362 {strides = array<i32>} : memref<24x32xi32, #tpu.memory_space<vmem>>, vector<1x32xi32>,
    %c0_i32_112 = arith.constant 0 : i32
    %363 = arith.cmpi eq, %arg1, %c0_i32_112 : i32
    %364 = arith.extui %363 : i1 to i32
    %c31_i32 = arith.constant 31 : i32
    %c0_i32_113 = arith.constant 0 : i32
    %365 = arith.cmpi ne, %364, %c0_i32_113 : i32
    scf.if %365 {
      %c0_114 = arith.constant 0 : index
      %c0_115 = arith.constant 0 : index
      %366 = vector.load %arg5[%c0_114, %c0_115] : memref<24x32xi32, #tpu.memory_space<vmem>>, vector<19x32xi32>
      %367 = vector.broadcast %c31_i32 : i32 to vector<19x32xi32>
      %368 = arith.andi %366, %367 : vector<19x32xi32>
      %c0_116 = arith.constant 0 : index
      %c0_117 = arith.constant 0 : index
      %369 = vector.load %arg4[%c0_116, %c0_117] : memref<19x32xi32, #tpu.memory_space<vmem>>, vector<19x32xi32>
      tpu.vector_store %arg4[%c0_116, %c0_117], %368 {strides = array<i32>} : memref<19x32xi32, #tpu.memory_space<vmem>>, vector<19x32xi32>,
    } else {
    }
    return
  }
  func.func @transform_0(%arg0: i32, %arg1: i32) -> (i32, i32) {
    %c0_i32 = arith.constant 0 : i32
    %c0_i32_0 = arith.constant 0 : i32
    return %c0_i32, %arg0 : i32, i32
  }
  func.func @transform_1(%arg0: i32, %arg1: i32) -> (i32, i32) {
    %c0_i32 = arith.constant 0 : i32
    %c0_i32_0 = arith.constant 0 : i32
    return %arg1, %c0_i32 : i32, i32
  }
  func.func @transform_2(%arg0: i32, %arg1: i32) -> (i32, i32) {
    %c0_i32 = arith.constant 0 : i32
    %c0_i32_0 = arith.constant 0 : i32
    return %c0_i32, %arg0 : i32, i32
  }
}

</mosaic_0001>

<llo_original>
// kernel: tpu_custom_call.1
$region0: #{tpu_custom_call.1}
  #allocation0 [shape = 'u32[]', space=smem, size = 0x4, offset = 0x4, fixed_abs, tag = 'smem constant byte address 0x4 - core index']
  #allocation1 [shape = 'u32[144,128]{1,0:T(1,128)}', space=vmem, size = 0x12000, scoped, tag = 'internal scratch']
  #allocation2 [shape = 's32[24,32]{1,0:T(8,128)}', space=vmem, size = 0x3000, scoped, tag = 'scratch operand']
  %s0 = inlined_call_operand.vmem [shape: f32[3,32], index: 0, kind: input, shape index: {}]
  %s1 = inlined_call_operand.vmem [shape: f32[32,3], index: 1, kind: input, shape index: {}]
  %s2 = inlined_call_operand.hbm [shape: s32[19,32], index: 2, kind: output, shape index: {}]
  %s3 = sld [smem:[#allocation0]]
  $region26: #{tpu_custom_call.1} parent=0
    _
  %s5 = ssub.s32 1, %s3
  %s6 = scalar_select 0, %s5, %s3
  $region1: #{tpu_custom_call.1} parent=0
    #allocation3 [shape = 'u8[12288]{0}', space=vmem, size = 0x3000, scoped, tag = 'output window, operand 0, single buffered']
    #allocation4 [shape = 's32[1]{0}', space=sflag, size = 0x4, scoped, tag = 'scoped memory for tpu_custom_call.1']
    %7 = vsyncpa [#allocation4], 0
    // Predicated region
    $region2: #{tpu_custom_call.1} parent=1 // pred_check
      _
    $region3: #{tpu_custom_call.1} parent=1 // pred_check_branch
      %9 = sbr.rel (0) target = $region5
    $region4: #{tpu_custom_call.1} parent=1 // pred_region
      _
    $region5: #{tpu_custom_call.1} parent=1 // pred_fallthru
      _
    // Predicated region
    $region6: #{tpu_custom_call.1} parent=1 // pred_check
      _
    $region7: #{tpu_custom_call.1} parent=1 // pred_check_branch
      %11 = sbr.rel (0) target = $region9
    $region8: #{tpu_custom_call.1} parent=1 // pred_region
      _
    $region9: #{tpu_custom_call.1} parent=1 // pred_fallthru
      _
    %s12 = smul.u32 0, 32
    %s13 = smul.u32 0, 32
    %p14 = scmp.eq.s32.totalorder 0, 0
    // Predicated region
    $region10: #{tpu_custom_call.1} parent=1 // pred_check
      %p15 = pneg %p14
    $region11: #{tpu_custom_call.1} parent=1 // pred_check_branch
      %17 = sbr.rel (%p15) target = $region13
    $region12: #{tpu_custom_call.1} parent=1 // pred_region
      %vm18 = vcmask 261120
      %19 = vst.msk [vmem:[#allocation2] sm:$0xff] %vm18, 2147483647
      %20 = vst.msk [vmem:[#allocation2 + $0x8] sm:$0xff] %vm18, 2147483647
      %21 = vst.msk [vmem:[#allocation2 + $0x10] sm:$0xff] %vm18, 2147483647
    $region13: #{tpu_custom_call.1} parent=1 // pred_fallthru
      _
    %v22 = vld [vmem:[%s0] sm:$0x1]
    %v23 = vld [vmem:[%s1] sm:$0xff]
    %v24 = vld [vmem:[%s1 + $0x8] sm:$0xff]
    %v25 = vld [vmem:[%s1 + $0x10] sm:$0xff]
    %v26 = vld [vmem:[%s1 + $0x18] sm:$0xff]
    %28 = vset.pattern.permute.xlu0 0
    %29 = vperm.xlu0 %28, %v23
    %v30 = vpop.permute.xlu0 %29
    %33 = vset.pattern.permute.xlu0 0
    %34 = vperm.xlu0 %33, %v24
    %v35 = vpop.permute.xlu0 %34
    %38 = vset.pattern.permute.xlu0 0
    %39 = vperm.xlu0 %38, %v25
    %v40 = vpop.permute.xlu0 %39
    %43 = vset.pattern.permute.xlu0 0
    %44 = vperm.xlu0 %43, %v26
    %v45 = vpop.permute.xlu0 %44
    %v47 = vlaneseq
    %v48 = vshrl.u32 %v47, 7
    %v49 = vsub.s32 0, %v48
    %v50 = vrot.slane %v22, %v49
    %v51 = vsub.f32 %v30, %v50
    %v52 = vsub.f32 %v35, %v50
    %v53 = vsub.f32 %v40, %v50
    %v54 = vsub.f32 %v45, %v50
    %v55 = vmul.f32 %v51, %v51
    %v56 = vmul.f32 %v52, %v52
    %v57 = vmul.f32 %v53, %v53
    %v58 = vmul.f32 %v54, %v54
    %v59 = vld [vmem:[%s0 + $0x1] sm:$0x1]
    %60 = vset.pattern.permute.xlu0 1
    %61 = vperm.xlu0 %60, %v23
    %v62 = vpop.permute.xlu0 %61
    %64 = vset.pattern.permute.xlu0 1
    %65 = vperm.xlu0 %64, %v24
    %v66 = vpop.permute.xlu0 %65
    %68 = vset.pattern.permute.xlu0 1
    %69 = vperm.xlu0 %68, %v25
    %v70 = vpop.permute.xlu0 %69
    %72 = vset.pattern.permute.xlu0 1
    %73 = vperm.xlu0 %72, %v26
    %v74 = vpop.permute.xlu0 %73
    %v76 = vlaneseq
    %v77 = vshrl.u32 %v76, 7
    %v78 = vsub.s32 0, %v77
    %v79 = vrot.slane %v59, %v78
    %v80 = vsub.f32 %v62, %v79
    %v81 = vsub.f32 %v66, %v79
    %v82 = vsub.f32 %v70, %v79
    %v83 = vsub.f32 %v74, %v79
    %v84 = vmul.f32 %v80, %v80
    %v85 = vmul.f32 %v81, %v81
    %v86 = vmul.f32 %v82, %v82
    %v87 = vmul.f32 %v83, %v83
    %v88 = vadd.f32 %v55, %v84
    %v89 = vadd.f32 %v56, %v85
    %v90 = vadd.f32 %v57, %v86
    %v91 = vadd.f32 %v58, %v87
    %v92 = vld [vmem:[%s0 + $0x2] sm:$0x1]
    %93 = vset.pattern.permute.xlu0 2
    %94 = vperm.xlu0 %93, %v23
    %v95 = vpop.permute.xlu0 %94
    %97 = vset.pattern.permute.xlu0 2
    %98 = vperm.xlu0 %97, %v24
    %v99 = vpop.permute.xlu0 %98
    %101 = vset.pattern.permute.xlu0 2
    %102 = vperm.xlu0 %101, %v25
    %v103 = vpop.permute.xlu0 %102
    %105 = vset.pattern.permute.xlu0 2
    %106 = vperm.xlu0 %105, %v26
    %v107 = vpop.permute.xlu0 %106
    %v109 = vlaneseq
    %v110 = vshrl.u32 %v109, 7
    %v111 = vsub.s32 0, %v110
    %v112 = vrot.slane %v92, %v111
    %v113 = vsub.f32 %v95, %v112
    %v114 = vsub.f32 %v99, %v112
    %v115 = vsub.f32 %v103, %v112
    %v116 = vsub.f32 %v107, %v112
    %v117 = vmul.f32 %v113, %v113
    %v118 = vmul.f32 %v114, %v114
    %v119 = vmul.f32 %v115, %v115
    %v120 = vmul.f32 %v116, %v116
    %v121 = vadd.f32 %v88, %v117
    %v122 = vadd.f32 %v89, %v118
    %v123 = vadd.f32 %v90, %v119
    %v124 = vadd.f32 %v91, %v120
    %v125 = vlaneseq
    %v126 = vshrl.u32 %v125, 7
    %v127 = vadd.s32 %v126, 8
    %v128 = vadd.s32 %v126, 16
    %v129 = vadd.s32 %v126, 24
    %v130 = vstv %s13
    %v131 = vadd.s32 %v126, %v130
    %v132 = vadd.s32 %v127, %v130
    %v133 = vadd.s32 %v128, %v130
    %v134 = vadd.s32 %v129, %v130
    %v135 = vlaneseq
    %v136 = vand.u32 %v135, 127
    %v137 = vstv %s12
    %v138 = vadd.s32 %v136, %v137
    %v143 = vand.u32 %v121, 4294967264
    %v144 = vand.u32 %v122, 4294967264
    %v145 = vand.u32 %v123, 4294967264
    %v146 = vand.u32 %v124, 4294967264
    %v147 = vor.u32 %v143, %v131
    %v148 = vor.u32 %v144, %v132
    %v149 = vor.u32 %v145, %v133
    %v150 = vor.u32 %v146, %v134
    %vm151 = vcmp.eq.s32.totalorder %v131, %v138
    %vm152 = vcmp.eq.s32.totalorder %v132, %v138
    %vm153 = vcmp.eq.s32.totalorder %v133, %v138
    %vm154 = vcmp.eq.s32.totalorder %v134, %v138
    %v155 = vsel %vm151, 2147483647, %v147
    %v156 = vsel %vm152, 2147483647, %v148
    %v157 = vsel %vm153, 2147483647, %v149
    %v158 = vsel %vm154, 2147483647, %v150
    %v159 = vld [vmem:[#allocation2] sm:$0xff]
    %v160 = vld [vmem:[#allocation2 + $0x8] sm:$0xff]
    %v161 = vld [vmem:[#allocation2 + $0x10] sm:$0xff]
    %vm162 = vcmp.gt.s32.totalorder %v159, 2147483648
    %vm163 = vcmp.gt.s32.totalorder %v160, 2147483648
    %vm164 = vcmp.gt.s32.totalorder %v161, 2147483648
    %v165 = vsel %vm162, %v159, 2147483647
    %v166 = vsel %vm163, %v160, 2147483647
    %v167 = vsel %vm164, %v161, 2147483647
    %vm168 = vcmask 261120
    %v169 = vsel %vm168, %v165, 2147483647
    %v170 = vsel %vm168, %v166, 2147483647
    %v171 = vsel %vm168, %v167, 2147483647
    %vm172 = vcmp.lt.s32.totalorder %v169, %v170
    %v173 = vsel %vm172, %v169, %v170
    %vm174 = vcmp.lt.s32.totalorder %v173, %v171
    %v175 = vsel %vm174, %v173, %v171
    %v176 = vrot.slane %v175, 4
    %vm177 = vcmp.lt.s32.totalorder %v175, %v176
    %v178 = vsel %vm177, %v175, %v176
    %v179 = vrot.slane %v178, 2
    %vm180 = vcmp.lt.s32.totalorder %v178, %v179
    %v181 = vsel %vm180, %v178, %v179
    %v182 = vrot.slane %v181, 1
    %vm183 = vcmp.lt.s32.totalorder %v181, %v182
    %v184 = vsel %vm183, %v181, %v182
    %vm185 = vcmp.gt.s32.totalorder %v155, 2147483648
    %vm186 = vcmp.gt.s32.totalorder %v156, 2147483648
    %vm187 = vcmp.gt.s32.totalorder %v157, 2147483648
    %vm188 = vcmp.gt.s32.totalorder %v158, 2147483648
    %v189 = vsel %vm185, %v155, 2147483647
    %v190 = vsel %vm186, %v156, 2147483647
    %v191 = vsel %vm187, %v157, 2147483647
    %v192 = vsel %vm188, %v158, 2147483647
    %v193 = vsel %vm168, %v189, 2147483647
    %v194 = vsel %vm168, %v190, 2147483647
    %v195 = vsel %vm168, %v191, 2147483647
    %v196 = vsel %vm168, %v192, 2147483647
    %vm197 = vcmp.lt.s32.totalorder %v193, %v194
    %v198 = vsel %vm197, %v193, %v194
    %vm199 = vcmp.lt.s32.totalorder %v195, %v196
    %v200 = vsel %vm199, %v195, %v196
    %vm201 = vcmp.lt.s32.totalorder %v198, %v200
    %v202 = vsel %vm201, %v198, %v200
    %v203 = vrot.slane %v202, 4
    %vm204 = vcmp.lt.s32.totalorder %v202, %v203
    %v205 = vsel %vm204, %v202, %v203
    %v206 = vrot.slane %v205, 2
    %vm207 = vcmp.lt.s32.totalorder %v205, %v206
    %v208 = vsel %vm207, %v205, %v206
    %v209 = vrot.slane %v208, 1
    %vm210 = vcmp.lt.s32.totalorder %v208, %v209
    %v211 = vsel %vm210, %v208, %v209
    %vm212 = vcmp.lt.s32.totalorder %v184, %v211
    %v213 = vsel %vm212, %v184, %v211
    %vm214 = vcmask 253952
    %215 = vst.msk [vmem:[#allocation2] sm:$0x1] %vm214, %v213
    %vm216 = vcmp.gt.s32.totalorder %v159, %v213
    %vm217 = vcmp.gt.s32.totalorder %v160, %v213
    %vm218 = vcmp.gt.s32.totalorder %v161, %v213
    %v219 = vsel %vm216, %v159, 2147483647
    %v220 = vsel %vm217, %v160, 2147483647
    %v221 = vsel %vm218, %v161, 2147483647
    %v222 = vsel %vm168, %v219, 2147483647
    %v223 = vsel %vm168, %v220, 2147483647
    %v224 = vsel %vm168, %v221, 2147483647
    %vm225 = vcmp.lt.s32.totalorder %v222, %v223
    %v226 = vsel %vm225, %v222, %v223
    %vm227 = vcmp.lt.s32.totalorder %v226, %v224
    %v228 = vsel %vm227, %v226, %v224
    %v229 = vrot.slane %v228, 4
    %vm230 = vcmp.lt.s32.totalorder %v228, %v229
    %v231 = vsel %vm230, %v228, %v229
    %v232 = vrot.slane %v231, 2
    %vm233 = vcmp.lt.s32.totalorder %v231, %v232
    %v234 = vsel %vm233, %v231, %v232
    %v235 = vrot.slane %v234, 1
    %vm236 = vcmp.lt.s32.totalorder %v234, %v235
    %v237 = vsel %vm236, %v234, %v235
    %vm238 = vcmp.gt.s32.totalorder %v155, %v213
    %vm239 = vcmp.gt.s32.totalorder %v156, %v213
    %vm240 = vcmp.gt.s32.totalorder %v157, %v213
    %vm241 = vcmp.gt.s32.totalorder %v158, %v213
    %v242 = vsel %vm238, %v155, 2147483647
    %v243 = vsel %vm239, %v156, 2147483647
    %v244 = vsel %vm240, %v157, 2147483647
    %v245 = vsel %vm241, %v158, 2147483647
    %v246 = vsel %vm168, %v242, 2147483647
    %v247 = vsel %vm168, %v243, 2147483647
    %v248 = vsel %vm168, %v244, 2147483647
    %v249 = vsel %vm168, %v245, 2147483647
    %vm250 = vcmp.lt.s32.totalorder %v246, %v247
    %v251 = vsel %vm250, %v246, %v247
    %vm252 = vcmp.lt.s32.totalorder %v248, %v249
    %v253 = vsel %vm252, %v248, %v249
    %vm254 = vcmp.lt.s32.totalorder %v251, %v253
    %v255 = vsel %vm254, %v251, %v253
    %v256 = vrot.slane %v255, 4
    %vm257 = vcmp.lt.s32.totalorder %v255, %v256
    %v258 = vsel %vm257, %v255, %v256
    %v259 = vrot.slane %v258, 2
    %vm260 = vcmp.lt.s32.totalorder %v258, %v259
    %v261 = vsel %vm260, %v258, %v259
    %v262 = vrot.slane %v261, 1
    %vm263 = vcmp.lt.s32.totalorder %v261, %v262
    %v264 = vsel %vm263, %v261, %v262
    %vm265 = vcmp.lt.s32.totalorder %v237, %v264
    %v266 = vsel %vm265, %v237, %v264
    %267 = vst.msk [vmem:[#allocation2 + $0x1] sm:$0x1] %vm214, %v266
    %vm268 = vcmp.gt.s32.totalorder %v159, %v266
    %vm269 = vcmp.gt.s32.totalorder %v160, %v266
    %vm270 = vcmp.gt.s32.totalorder %v161, %v266
    %v271 = vsel %vm268, %v159, 2147483647
    %v272 = vsel %vm269, %v160, 2147483647
    %v273 = vsel %vm270, %v161, 2147483647
    %v274 = vsel %vm168, %v271, 2147483647
    %v275 = vsel %vm168, %v272, 2147483647
    %v276 = vsel %vm168, %v273, 2147483647
    %vm277 = vcmp.lt.s32.totalorder %v274, %v275
    %v278 = vsel %vm277, %v274, %v275
    %vm279 = vcmp.lt.s32.totalorder %v278, %v276
    %v280 = vsel %vm279, %v278, %v276
    %v281 = vrot.slane %v280, 4
    %vm282 = vcmp.lt.s32.totalorder %v280, %v281
    %v283 = vsel %vm282, %v280, %v281
    %v284 = vrot.slane %v283, 2
    %vm285 = vcmp.lt.s32.totalorder %v283, %v284
    %v286 = vsel %vm285, %v283, %v284
    %v287 = vrot.slane %v286, 1
    %vm288 = vcmp.lt.s32.totalorder %v286, %v287
    %v289 = vsel %vm288, %v286, %v287
    %vm290 = vcmp.gt.s32.totalorder %v155, %v266
    %vm291 = vcmp.gt.s32.totalorder %v156, %v266
    %vm292 = vcmp.gt.s32.totalorder %v157, %v266
    %vm293 = vcmp.gt.s32.totalorder %v158, %v266
    %v294 = vsel %vm290, %v155, 2147483647
    %v295 = vsel %vm291, %v156, 2147483647
    %v296 = vsel %vm292, %v157, 2147483647
    %v297 = vsel %vm293, %v158, 2147483647
    %v298 = vsel %vm168, %v294, 2147483647
    %v299 = vsel %vm168, %v295, 2147483647
    %v300 = vsel %vm168, %v296, 2147483647
    %v301 = vsel %vm168, %v297, 2147483647
    %vm302 = vcmp.lt.s32.totalorder %v298, %v299
    %v303 = vsel %vm302, %v298, %v299
    %vm304 = vcmp.lt.s32.totalorder %v300, %v301
    %v305 = vsel %vm304, %v300, %v301
    %vm306 = vcmp.lt.s32.totalorder %v303, %v305
    %v307 = vsel %vm306, %v303, %v305
    %v308 = vrot.slane %v307, 4
    %vm309 = vcmp.lt.s32.totalorder %v307, %v308
    %v310 = vsel %vm309, %v307, %v308
    %v311 = vrot.slane %v310, 2
    %vm312 = vcmp.lt.s32.totalorder %v310, %v311
    %v313 = vsel %vm312, %v310, %v311
    %v314 = vrot.slane %v313, 1
    %vm315 = vcmp.lt.s32.totalorder %v313, %v314
    %v316 = vsel %vm315, %v313, %v314
    %vm317 = vcmp.lt.s32.totalorder %v289, %v316
    %v318 = vsel %vm317, %v289, %v316
    %319 = vst.msk [vmem:[#allocation2 + $0x2] sm:$0x1] %vm214, %v318
    %vm320 = vcmp.gt.s32.totalorder %v159, %v318
    %vm321 = vcmp.gt.s32.totalorder %v160, %v318
    %vm322 = vcmp.gt.s32.totalorder %v161, %v318
    %v323 = vsel %vm320, %v159, 2147483647
    %v324 = vsel %vm321, %v160, 2147483647
    %v325 = vsel %vm322, %v161, 2147483647
    %v326 = vsel %vm168, %v323, 2147483647
    %v327 = vsel %vm168, %v324, 2147483647
    %v328 = vsel %vm168, %v325, 2147483647
    %vm329 = vcmp.lt.s32.totalorder %v326, %v327
    %v330 = vsel %vm329, %v326, %v327
    %vm331 = vcmp.lt.s32.totalorder %v330, %v328
    %v332 = vsel %vm331, %v330, %v328
    %v333 = vrot.slane %v332, 4
    %vm334 = vcmp.lt.s32.totalorder %v332, %v333
    %v335 = vsel %vm334, %v332, %v333
    %v336 = vrot.slane %v335, 2
    %vm337 = vcmp.lt.s32.totalorder %v335, %v336
    %v338 = vsel %vm337, %v335, %v336
    %v339 = vrot.slane %v338, 1
    %vm340 = vcmp.lt.s32.totalorder %v338, %v339
    %v341 = vsel %vm340, %v338, %v339
    %vm342 = vcmp.gt.s32.totalorder %v155, %v318
    %vm343 = vcmp.gt.s32.totalorder %v156, %v318
    %vm344 = vcmp.gt.s32.totalorder %v157, %v318
    %vm345 = vcmp.gt.s32.totalorder %v158, %v318
    %v346 = vsel %vm342, %v155, 2147483647
    %v347 = vsel %vm343, %v156, 2147483647
    %v348 = vsel %vm344, %v157, 2147483647
    %v349 = vsel %vm345, %v158, 2147483647
    %v350 = vsel %vm168, %v346, 2147483647
    %v351 = vsel %vm168, %v347, 2147483647
    %v352 = vsel %vm168, %v348, 2147483647
    %v353 = vsel %vm168, %v349, 2147483647
    %vm354 = vcmp.lt.s32.totalorder %v350, %v351
    %v355 = vsel %vm354, %v350, %v351
    %vm356 = vcmp.lt.s32.totalorder %v352, %v353
    %v357 = vsel %vm356, %v352, %v353
    %vm358 = vcmp.lt.s32.totalorder %v355, %v357
    %v359 = vsel %vm358, %v355, %v357
    %v360 = vrot.slane %v359, 4
    %vm361 = vcmp.lt.s32.totalorder %v359, %v360
    %v362 = vsel %vm361, %v359, %v360
    %v363 = vrot.slane %v362, 2
    %vm364 = vcmp.lt.s32.totalorder %v362, %v363
    %v365 = vsel %vm364, %v362, %v363
    %v366 = vrot.slane %v365, 1
    %vm367 = vcmp.lt.s32.totalorder %v365, %v366
    %v368 = vsel %vm367, %v365, %v366
    %vm369 = vcmp.lt.s32.totalorder %v341, %v368
    %v370 = vsel %vm369, %v341, %v368
    %371 = vst.msk [vmem:[#allocation2 + $0x3] sm:$0x1] %vm214, %v370
    %vm372 = vcmp.gt.s32.totalorder %v159, %v370
    %vm373 = vcmp.gt.s32.totalorder %v160, %v370
    %vm374 = vcmp.gt.s32.totalorder %v161, %v370
    %v375 = vsel %vm372, %v159, 2147483647
    %v376 = vsel %vm373, %v160, 2147483647
    %v377 = vsel %vm374, %v161, 2147483647
    %v378 = vsel %vm168, %v375, 2147483647
    %v379 = vsel %vm168, %v376, 2147483647
    %v380 = vsel %vm168, %v377, 2147483647
    %vm381 = vcmp.lt.s32.totalorder %v378, %v379
    %v382 = vsel %vm381, %v378, %v379
    %vm383 = vcmp.lt.s32.totalorder %v382, %v380
    %v384 = vsel %vm383, %v382, %v380
    %v385 = vrot.slane %v384, 4
    %vm386 = vcmp.lt.s32.totalorder %v384, %v385
    %v387 = vsel %vm386, %v384, %v385
    %v388 = vrot.slane %v387, 2
    %vm389 = vcmp.lt.s32.totalorder %v387, %v388
    %v390 = vsel %vm389, %v387, %v388
    %v391 = vrot.slane %v390, 1
    %vm392 = vcmp.lt.s32.totalorder %v390, %v391
    %v393 = vsel %vm392, %v390, %v391
    %vm394 = vcmp.gt.s32.totalorder %v155, %v370
    %vm395 = vcmp.gt.s32.totalorder %v156, %v370
    %vm396 = vcmp.gt.s32.totalorder %v157, %v370
    %vm397 = vcmp.gt.s32.totalorder %v158, %v370
    %v398 = vsel %vm394, %v155, 2147483647
    %v399 = vsel %vm395, %v156, 2147483647
    %v400 = vsel %vm396, %v157, 2147483647
    %v401 = vsel %vm397, %v158, 2147483647
    %v402 = vsel %vm168, %v398, 2147483647
    %v403 = vsel %vm168, %v399, 2147483647
    %v404 = vsel %vm168, %v400, 2147483647
    %v405 = vsel %vm168, %v401, 2147483647
    %vm406 = vcmp.lt.s32.totalorder %v402, %v403
    %v407 = vsel %vm406, %v402, %v403
    %vm408 = vcmp.lt.s32.totalorder %v404, %v405
    %v409 = vsel %vm408, %v404, %v405
    %vm410 = vcmp.lt.s32.totalorder %v407, %v409
    %v411 = vsel %vm410, %v407, %v409
    %v412 = vrot.slane %v411, 4
    %vm413 = vcmp.lt.s32.totalorder %v411, %v412
    %v414 = vsel %vm413, %v411, %v412
    %v415 = vrot.slane %v414, 2
    %vm416 = vcmp.lt.s32.totalorder %v414, %v415
    %v417 = vsel %vm416, %v414, %v415
    %v418 = vrot.slane %v417, 1
    %vm419 = vcmp.lt.s32.totalorder %v417, %v418
    %v420 = vsel %vm419, %v417, %v418
    %vm421 = vcmp.lt.s32.totalorder %v393, %v420
    %v422 = vsel %vm421, %v393, %v420
    %423 = vst.msk [vmem:[#allocation2 + $0x4] sm:$0x1] %vm214, %v422
    %vm424 = vcmp.gt.s32.totalorder %v159, %v422
    %vm425 = vcmp.gt.s32.totalorder %v160, %v422
    %vm426 = vcmp.gt.s32.totalorder %v161, %v422
    %v427 = vsel %vm424, %v159, 2147483647
    %v428 = vsel %vm425, %v160, 2147483647
    %v429 = vsel %vm426, %v161, 2147483647
    %v430 = vsel %vm168, %v427, 2147483647
    %v431 = vsel %vm168, %v428, 2147483647
    %v432 = vsel %vm168, %v429, 2147483647
    %vm433 = vcmp.lt.s32.totalorder %v430, %v431
    %v434 = vsel %vm433, %v430, %v431
    %vm435 = vcmp.lt.s32.totalorder %v434, %v432
    %v436 = vsel %vm435, %v434, %v432
    %v437 = vrot.slane %v436, 4
    %vm438 = vcmp.lt.s32.totalorder %v436, %v437
    %v439 = vsel %vm438, %v436, %v437
    %v440 = vrot.slane %v439, 2
    %vm441 = vcmp.lt.s32.totalorder %v439, %v440
    %v442 = vsel %vm441, %v439, %v440
    %v443 = vrot.slane %v442, 1
    %vm444 = vcmp.lt.s32.totalorder %v442, %v443
    %v445 = vsel %vm444, %v442, %v443
    %vm446 = vcmp.gt.s32.totalorder %v155, %v422
    %vm447 = vcmp.gt.s32.totalorder %v156, %v422
    %vm448 = vcmp.gt.s32.totalorder %v157, %v422
    %vm449 = vcmp.gt.s32.totalorder %v158, %v422
    %v450 = vsel %vm446, %v155, 2147483647
    %v451 = vsel %vm447, %v156, 2147483647
    %v452 = vsel %vm448, %v157, 2147483647
    %v453 = vsel %vm449, %v158, 2147483647
    %v454 = vsel %vm168, %v450, 2147483647
    %v455 = vsel %vm168, %v451, 2147483647
    %v456 = vsel %vm168, %v452, 2147483647
    %v457 = vsel %vm168, %v453, 2147483647
    %vm458 = vcmp.lt.s32.totalorder %v454, %v455
    %v459 = vsel %vm458, %v454, %v455
    %vm460 = vcmp.lt.s32.totalorder %v456, %v457
    %v461 = vsel %vm460, %v456, %v457
    %vm462 = vcmp.lt.s32.totalorder %v459, %v461
    %v463 = vsel %vm462, %v459, %v461
    %v464 = vrot.slane %v463, 4
    %vm465 = vcmp.lt.s32.totalorder %v463, %v464
    %v466 = vsel %vm465, %v463, %v464
    %v467 = vrot.slane %v466, 2
    %vm468 = vcmp.lt.s32.totalorder %v466, %v467
    %v469 = vsel %vm468, %v466, %v467
    %v470 = vrot.slane %v469, 1
    %vm471 = vcmp.lt.s32.totalorder %v469, %v470
    %v472 = vsel %vm471, %v469, %v470
    %vm473 = vcmp.lt.s32.totalorder %v445, %v472
    %v474 = vsel %vm473, %v445, %v472
    %475 = vst.msk [vmem:[#allocation2 + $0x5] sm:$0x1] %vm214, %v474
    %vm476 = vcmp.gt.s32.totalorder %v159, %v474
    %vm477 = vcmp.gt.s32.totalorder %v160, %v474
    %vm478 = vcmp.gt.s32.totalorder %v161, %v474
    %v479 = vsel %vm476, %v159, 2147483647
    %v480 = vsel %vm477, %v160, 2147483647
    %v481 = vsel %vm478, %v161, 2147483647
    %v482 = vsel %vm168, %v479, 2147483647
    %v483 = vsel %vm168, %v480, 2147483647
    %v484 = vsel %vm168, %v481, 2147483647
    %vm485 = vcmp.lt.s32.totalorder %v482, %v483
    %v486 = vsel %vm485, %v482, %v483
    %vm487 = vcmp.lt.s32.totalorder %v486, %v484
    %v488 = vsel %vm487, %v486, %v484
    %v489 = vrot.slane %v488, 4
    %vm490 = vcmp.lt.s32.totalorder %v488, %v489
    %v491 = vsel %vm490, %v488, %v489
    %v492 = vrot.slane %v491, 2
    %vm493 = vcmp.lt.s32.totalorder %v491, %v492
    %v494 = vsel %vm493, %v491, %v492
    %v495 = vrot.slane %v494, 1
    %vm496 = vcmp.lt.s32.totalorder %v494, %v495
    %v497 = vsel %vm496, %v494, %v495
    %vm498 = vcmp.gt.s32.totalorder %v155, %v474
    %vm499 = vcmp.gt.s32.totalorder %v156, %v474
    %vm500 = vcmp.gt.s32.totalorder %v157, %v474
    %vm501 = vcmp.gt.s32.totalorder %v158, %v474
    %v502 = vsel %vm498, %v155, 2147483647
    %v503 = vsel %vm499, %v156, 2147483647
    %v504 = vsel %vm500, %v157, 2147483647
    %v505 = vsel %vm501, %v158, 2147483647
    %v506 = vsel %vm168, %v502, 2147483647
    %v507 = vsel %vm168, %v503, 2147483647
    %v508 = vsel %vm168, %v504, 2147483647
    %v509 = vsel %vm168, %v505, 2147483647
    %vm510 = vcmp.lt.s32.totalorder %v506, %v507
    %v511 = vsel %vm510, %v506, %v507
    %vm512 = vcmp.lt.s32.totalorder %v508, %v509
    %v513 = vsel %vm512, %v508, %v509
    %vm514 = vcmp.lt.s32.totalorder %v511, %v513
    %v515 = vsel %vm514, %v511, %v513
    %v516 = vrot.slane %v515, 4
    %vm517 = vcmp.lt.s32.totalorder %v515, %v516
    %v518 = vsel %vm517, %v515, %v516
    %v519 = vrot.slane %v518, 2
    %vm520 = vcmp.lt.s32.totalorder %v518, %v519
    %v521 = vsel %vm520, %v518, %v519
    %v522 = vrot.slane %v521, 1
    %vm523 = vcmp.lt.s32.totalorder %v521, %v522
    %v524 = vsel %vm523, %v521, %v522
    %vm525 = vcmp.lt.s32.totalorder %v497, %v524
    %v526 = vsel %vm525, %v497, %v524
    %527 = vst.msk [vmem:[#allocation2 + $0x6] sm:$0x1] %vm214, %v526
    %vm528 = vcmp.gt.s32.totalorder %v159, %v526
    %vm529 = vcmp.gt.s32.totalorder %v160, %v526
    %vm530 = vcmp.gt.s32.totalorder %v161, %v526
    %v531 = vsel %vm528, %v159, 2147483647
    %v532 = vsel %vm529, %v160, 2147483647
    %v533 = vsel %vm530, %v161, 2147483647
    %v534 = vsel %vm168, %v531, 2147483647
    %v535 = vsel %vm168, %v532, 2147483647
    %v536 = vsel %vm168, %v533, 2147483647
    %vm537 = vcmp.lt.s32.totalorder %v534, %v535
    %v538 = vsel %vm537, %v534, %v535
    %vm539 = vcmp.lt.s32.totalorder %v538, %v536
    %v540 = vsel %vm539, %v538, %v536
    %v541 = vrot.slane %v540, 4
    %vm542 = vcmp.lt.s32.totalorder %v540, %v541
    %v543 = vsel %vm542, %v540, %v541
    %v544 = vrot.slane %v543, 2
    %vm545 = vcmp.lt.s32.totalorder %v543, %v544
    %v546 = vsel %vm545, %v543, %v544
    %v547 = vrot.slane %v546, 1
    %vm548 = vcmp.lt.s32.totalorder %v546, %v547
    %v549 = vsel %vm548, %v546, %v547
    %vm550 = vcmp.gt.s32.totalorder %v155, %v526
    %vm551 = vcmp.gt.s32.totalorder %v156, %v526
    %vm552 = vcmp.gt.s32.totalorder %v157, %v526
    %vm553 = vcmp.gt.s32.totalorder %v158, %v526
    %v554 = vsel %vm550, %v155, 2147483647
    %v555 = vsel %vm551, %v156, 2147483647
    %v556 = vsel %vm552, %v157, 2147483647
    %v557 = vsel %vm553, %v158, 2147483647
    %v558 = vsel %vm168, %v554, 2147483647
    %v559 = vsel %vm168, %v555, 2147483647
    %v560 = vsel %vm168, %v556, 2147483647
    %v561 = vsel %vm168, %v557, 2147483647
    %vm562 = vcmp.lt.s32.totalorder %v558, %v559
    %v563 = vsel %vm562, %v558, %v559
    %vm564 = vcmp.lt.s32.totalorder %v560, %v561
    %v565 = vsel %vm564, %v560, %v561
    %vm566 = vcmp.lt.s32.totalorder %v563, %v565
    %v567 = vsel %vm566, %v563, %v565
    %v568 = vrot.slane %v567, 4
    %vm569 = vcmp.lt.s32.totalorder %v567, %v568
    %v570 = vsel %vm569, %v567, %v568
    %v571 = vrot.slane %v570, 2
    %vm572 = vcmp.lt.s32.totalorder %v570, %v571
    %v573 = vsel %vm572, %v570, %v571
    %v574 = vrot.slane %v573, 1
    %vm575 = vcmp.lt.s32.totalorder %v573, %v574
    %v576 = vsel %vm575, %v573, %v574
    %vm577 = vcmp.lt.s32.totalorder %v549, %v576
    %v578 = vsel %vm577, %v549, %v576
    %579 = vst.msk [vmem:[#allocation2 + $0x7] sm:$0x1] %vm214, %v578
    %vm580 = vcmp.gt.s32.totalorder %v159, %v578
    %vm581 = vcmp.gt.s32.totalorder %v160, %v578
    %vm582 = vcmp.gt.s32.totalorder %v161, %v578
    %v583 = vsel %vm580, %v159, 2147483647
    %v584 = vsel %vm581, %v160, 2147483647
    %v585 = vsel %vm582, %v161, 2147483647
    %v586 = vsel %vm168, %v583, 2147483647
    %v587 = vsel %vm168, %v584, 2147483647
    %v588 = vsel %vm168, %v585, 2147483647
    %vm589 = vcmp.lt.s32.totalorder %v586, %v587
    %v590 = vsel %vm589, %v586, %v587
    %vm591 = vcmp.lt.s32.totalorder %v590, %v588
    %v592 = vsel %vm591, %v590, %v588
    %v593 = vrot.slane %v592, 4
    %vm594 = vcmp.lt.s32.totalorder %v592, %v593
    %v595 = vsel %vm594, %v592, %v593
    %v596 = vrot.slane %v595, 2
    %vm597 = vcmp.lt.s32.totalorder %v595, %v596
    %v598 = vsel %vm597, %v595, %v596
    %v599 = vrot.slane %v598, 1
    %vm600 = vcmp.lt.s32.totalorder %v598, %v599
    %v601 = vsel %vm600, %v598, %v599
    %vm602 = vcmp.gt.s32.totalorder %v155, %v578
    %vm603 = vcmp.gt.s32.totalorder %v156, %v578
    %vm604 = vcmp.gt.s32.totalorder %v157, %v578
    %vm605 = vcmp.gt.s32.totalorder %v158, %v578
    %v606 = vsel %vm602, %v155, 2147483647
    %v607 = vsel %vm603, %v156, 2147483647
    %v608 = vsel %vm604, %v157, 2147483647
    %v609 = vsel %vm605, %v158, 2147483647
    %v610 = vsel %vm168, %v606, 2147483647
    %v611 = vsel %vm168, %v607, 2147483647
    %v612 = vsel %vm168, %v608, 2147483647
    %v613 = vsel %vm168, %v609, 2147483647
    %vm614 = vcmp.lt.s32.totalorder %v610, %v611
    %v615 = vsel %vm614, %v610, %v611
    %vm616 = vcmp.lt.s32.totalorder %v612, %v613
    %v617 = vsel %vm616, %v612, %v613
    %vm618 = vcmp.lt.s32.totalorder %v615, %v617
    %v619 = vsel %vm618, %v615, %v617
    %v620 = vrot.slane %v619, 4
    %vm621 = vcmp.lt.s32.totalorder %v619, %v620
    %v622 = vsel %vm621, %v619, %v620
    %v623 = vrot.slane %v622, 2
    %vm624 = vcmp.lt.s32.totalorder %v622, %v623
    %v625 = vsel %vm624, %v622, %v623
    %v626 = vrot.slane %v625, 1
    %vm627 = vcmp.lt.s32.totalorder %v625, %v626
    %v628 = vsel %vm627, %v625, %v626
    %vm629 = vcmp.lt.s32.totalorder %v601, %v628
    %v630 = vsel %vm629, %v601, %v628
    %631 = vst.msk [vmem:[#allocation2 + $0x8] sm:$0x1] %vm214, %v630
    %vm632 = vcmp.gt.s32.totalorder %v159, %v630
    %vm633 = vcmp.gt.s32.totalorder %v160, %v630
    %vm634 = vcmp.gt.s32.totalorder %v161, %v630
    %v635 = vsel %vm632, %v159, 2147483647
    %v636 = vsel %vm633, %v160, 2147483647
    %v637 = vsel %vm634, %v161, 2147483647
    %v638 = vsel %vm168, %v635, 2147483647
    %v639 = vsel %vm168, %v636, 2147483647
    %v640 = vsel %vm168, %v637, 2147483647
    %vm641 = vcmp.lt.s32.totalorder %v638, %v639
    %v642 = vsel %vm641, %v638, %v639
    %vm643 = vcmp.lt.s32.totalorder %v642, %v640
    %v644 = vsel %vm643, %v642, %v640
    %v645 = vrot.slane %v644, 4
    %vm646 = vcmp.lt.s32.totalorder %v644, %v645
    %v647 = vsel %vm646, %v644, %v645
    %v648 = vrot.slane %v647, 2
    %vm649 = vcmp.lt.s32.totalorder %v647, %v648
    %v650 = vsel %vm649, %v647, %v648
    %v651 = vrot.slane %v650, 1
    %vm652 = vcmp.lt.s32.totalorder %v650, %v651
    %v653 = vsel %vm652, %v650, %v651
    %vm654 = vcmp.gt.s32.totalorder %v155, %v630
    %vm655 = vcmp.gt.s32.totalorder %v156, %v630
    %vm656 = vcmp.gt.s32.totalorder %v157, %v630
    %vm657 = vcmp.gt.s32.totalorder %v158, %v630
    %v658 = vsel %vm654, %v155, 2147483647
    %v659 = vsel %vm655, %v156, 2147483647
    %v660 = vsel %vm656, %v157, 2147483647
    %v661 = vsel %vm657, %v158, 2147483647
    %v662 = vsel %vm168, %v658, 2147483647
    %v663 = vsel %vm168, %v659, 2147483647
    %v664 = vsel %vm168, %v660, 2147483647
    %v665 = vsel %vm168, %v661, 2147483647
    %vm666 = vcmp.lt.s32.totalorder %v662, %v663
    %v667 = vsel %vm666, %v662, %v663
    %vm668 = vcmp.lt.s32.totalorder %v664, %v665
    %v669 = vsel %vm668, %v664, %v665
    %vm670 = vcmp.lt.s32.totalorder %v667, %v669
    %v671 = vsel %vm670, %v667, %v669
    %v672 = vrot.slane %v671, 4
    %vm673 = vcmp.lt.s32.totalorder %v671, %v672
    %v674 = vsel %vm673, %v671, %v672
    %v675 = vrot.slane %v674, 2
    %vm676 = vcmp.lt.s32.totalorder %v674, %v675
    %v677 = vsel %vm676, %v674, %v675
    %v678 = vrot.slane %v677, 1
    %vm679 = vcmp.lt.s32.totalorder %v677, %v678
    %v680 = vsel %vm679, %v677, %v678
    %vm681 = vcmp.lt.s32.totalorder %v653, %v680
    %v682 = vsel %vm681, %v653, %v680
    %683 = vst.msk [vmem:[#allocation2 + $0x9] sm:$0x1] %vm214, %v682
    %vm684 = vcmp.gt.s32.totalorder %v159, %v682
    %vm685 = vcmp.gt.s32.totalorder %v160, %v682
    %vm686 = vcmp.gt.s32.totalorder %v161, %v682
    %v687 = vsel %vm684, %v159, 2147483647
    %v688 = vsel %vm685, %v160, 2147483647
    %v689 = vsel %vm686, %v161, 2147483647
    %v690 = vsel %vm168, %v687, 2147483647
    %v691 = vsel %vm168, %v688, 2147483647
    %v692 = vsel %vm168, %v689, 2147483647
    %vm693 = vcmp.lt.s32.totalorder %v690, %v691
    %v694 = vsel %vm693, %v690, %v691
    %vm695 = vcmp.lt.s32.totalorder %v694, %v692
    %v696 = vsel %vm695, %v694, %v692
    %v697 = vrot.slane %v696, 4
    %vm698 = vcmp.lt.s32.totalorder %v696, %v697
    %v699 = vsel %vm698, %v696, %v697
    %v700 = vrot.slane %v699, 2
    %vm701 = vcmp.lt.s32.totalorder %v699, %v700
    %v702 = vsel %vm701, %v699, %v700
    %v703 = vrot.slane %v702, 1
    %vm704 = vcmp.lt.s32.totalorder %v702, %v703
    %v705 = vsel %vm704, %v702, %v703
    %vm706 = vcmp.gt.s32.totalorder %v155, %v682
    %vm707 = vcmp.gt.s32.totalorder %v156, %v682
    %vm708 = vcmp.gt.s32.totalorder %v157, %v682
    %vm709 = vcmp.gt.s32.totalorder %v158, %v682
    %v710 = vsel %vm706, %v155, 2147483647
    %v711 = vsel %vm707, %v156, 2147483647
    %v712 = vsel %vm708, %v157, 2147483647
    %v713 = vsel %vm709, %v158, 2147483647
    %v714 = vsel %vm168, %v710, 2147483647
    %v715 = vsel %vm168, %v711, 2147483647
    %v716 = vsel %vm168, %v712, 2147483647
    %v717 = vsel %vm168, %v713, 2147483647
    %vm718 = vcmp.lt.s32.totalorder %v714, %v715
    %v719 = vsel %vm718, %v714, %v715
    %vm720 = vcmp.lt.s32.totalorder %v716, %v717
    %v721 = vsel %vm720, %v716, %v717
    %vm722 = vcmp.lt.s32.totalorder %v719, %v721
    %v723 = vsel %vm722, %v719, %v721
    %v724 = vrot.slane %v723, 4
    %vm725 = vcmp.lt.s32.totalorder %v723, %v724
    %v726 = vsel %vm725, %v723, %v724
    %v727 = vrot.slane %v726, 2
    %vm728 = vcmp.lt.s32.totalorder %v726, %v727
    %v729 = vsel %vm728, %v726, %v727
    %v730 = vrot.slane %v729, 1
    %vm731 = vcmp.lt.s32.totalorder %v729, %v730
    %v732 = vsel %vm731, %v729, %v730
    %vm733 = vcmp.lt.s32.totalorder %v705, %v732
    %v734 = vsel %vm733, %v705, %v732
    %735 = vst.msk [vmem:[#allocation2 + $0xa] sm:$0x1] %vm214, %v734
    %vm736 = vcmp.gt.s32.totalorder %v159, %v734
    %vm737 = vcmp.gt.s32.totalorder %v160, %v734
    %vm738 = vcmp.gt.s32.totalorder %v161, %v734
    %v739 = vsel %vm736, %v159, 2147483647
    %v740 = vsel %vm737, %v160, 2147483647
    %v741 = vsel %vm738, %v161, 2147483647
    %v742 = vsel %vm168, %v739, 2147483647
    %v743 = vsel %vm168, %v740, 2147483647
    %v744 = vsel %vm168, %v741, 2147483647
    %vm745 = vcmp.lt.s32.totalorder %v742, %v743
    %v746 = vsel %vm745, %v742, %v743
    %vm747 = vcmp.lt.s32.totalorder %v746, %v744
    %v748 = vsel %vm747, %v746, %v744
    %v749 = vrot.slane %v748, 4
    %vm750 = vcmp.lt.s32.totalorder %v748, %v749
    %v751 = vsel %vm750, %v748, %v749
    %v752 = vrot.slane %v751, 2
    %vm753 = vcmp.lt.s32.totalorder %v751, %v752
    %v754 = vsel %vm753, %v751, %v752
    %v755 = vrot.slane %v754, 1
    %vm756 = vcmp.lt.s32.totalorder %v754, %v755
    %v757 = vsel %vm756, %v754, %v755
    %vm758 = vcmp.gt.s32.totalorder %v155, %v734
    %vm759 = vcmp.gt.s32.totalorder %v156, %v734
    %vm760 = vcmp.gt.s32.totalorder %v157, %v734
    %vm761 = vcmp.gt.s32.totalorder %v158, %v734
    %v762 = vsel %vm758, %v155, 2147483647
    %v763 = vsel %vm759, %v156, 2147483647
    %v764 = vsel %vm760, %v157, 2147483647
    %v765 = vsel %vm761, %v158, 2147483647
    %v766 = vsel %vm168, %v762, 2147483647
    %v767 = vsel %vm168, %v763, 2147483647
    %v768 = vsel %vm168, %v764, 2147483647
    %v769 = vsel %vm168, %v765, 2147483647
    %vm770 = vcmp.lt.s32.totalorder %v766, %v767
    %v771 = vsel %vm770, %v766, %v767
    %vm772 = vcmp.lt.s32.totalorder %v768, %v769
    %v773 = vsel %vm772, %v768, %v769
    %vm774 = vcmp.lt.s32.totalorder %v771, %v773
    %v775 = vsel %vm774, %v771, %v773
    %v776 = vrot.slane %v775, 4
    %vm777 = vcmp.lt.s32.totalorder %v775, %v776
    %v778 = vsel %vm777, %v775, %v776
    %v779 = vrot.slane %v778, 2
    %vm780 = vcmp.lt.s32.totalorder %v778, %v779
    %v781 = vsel %vm780, %v778, %v779
    %v782 = vrot.slane %v781, 1
    %vm783 = vcmp.lt.s32.totalorder %v781, %v782
    %v784 = vsel %vm783, %v781, %v782
    %vm785 = vcmp.lt.s32.totalorder %v757, %v784
    %v786 = vsel %vm785, %v757, %v784
    %787 = vst.msk [vmem:[#allocation2 + $0xb] sm:$0x1] %vm214, %v786
    %vm788 = vcmp.gt.s32.totalorder %v159, %v786
    %vm789 = vcmp.gt.s32.totalorder %v160, %v786
    %vm790 = vcmp.gt.s32.totalorder %v161, %v786
    %v791 = vsel %vm788, %v159, 2147483647
    %v792 = vsel %vm789, %v160, 2147483647
    %v793 = vsel %vm790, %v161, 2147483647
    %v794 = vsel %vm168, %v791, 2147483647
    %v795 = vsel %vm168, %v792, 2147483647
    %v796 = vsel %vm168, %v793, 2147483647
    %vm797 = vcmp.lt.s32.totalorder %v794, %v795
    %v798 = vsel %vm797, %v794, %v795
    %vm799 = vcmp.lt.s32.totalorder %v798, %v796
    %v800 = vsel %vm799, %v798, %v796
    %v801 = vrot.slane %v800, 4
    %vm802 = vcmp.lt.s32.totalorder %v800, %v801
    %v803 = vsel %vm802, %v800, %v801
    %v804 = vrot.slane %v803, 2
    %vm805 = vcmp.lt.s32.totalorder %v803, %v804
    %v806 = vsel %vm805, %v803, %v804
    %v807 = vrot.slane %v806, 1
    %vm808 = vcmp.lt.s32.totalorder %v806, %v807
    %v809 = vsel %vm808, %v806, %v807
    %vm810 = vcmp.gt.s32.totalorder %v155, %v786
    %vm811 = vcmp.gt.s32.totalorder %v156, %v786
    %vm812 = vcmp.gt.s32.totalorder %v157, %v786
    %vm813 = vcmp.gt.s32.totalorder %v158, %v786
    %v814 = vsel %vm810, %v155, 2147483647
    %v815 = vsel %vm811, %v156, 2147483647
    %v816 = vsel %vm812, %v157, 2147483647
    %v817 = vsel %vm813, %v158, 2147483647
    %v818 = vsel %vm168, %v814, 2147483647
    %v819 = vsel %vm168, %v815, 2147483647
    %v820 = vsel %vm168, %v816, 2147483647
    %v821 = vsel %vm168, %v817, 2147483647
    %vm822 = vcmp.lt.s32.totalorder %v818, %v819
    %v823 = vsel %vm822, %v818, %v819
    %vm824 = vcmp.lt.s32.totalorder %v820, %v821
    %v825 = vsel %vm824, %v820, %v821
    %vm826 = vcmp.lt.s32.totalorder %v823, %v825
    %v827 = vsel %vm826, %v823, %v825
    %v828 = vrot.slane %v827, 4
    %vm829 = vcmp.lt.s32.totalorder %v827, %v828
    %v830 = vsel %vm829, %v827, %v828
    %v831 = vrot.slane %v830, 2
    %vm832 = vcmp.lt.s32.totalorder %v830, %v831
    %v833 = vsel %vm832, %v830, %v831
    %v834 = vrot.slane %v833, 1
    %vm835 = vcmp.lt.s32.totalorder %v833, %v834
    %v836 = vsel %vm835, %v833, %v834
    %vm837 = vcmp.lt.s32.totalorder %v809, %v836
    %v838 = vsel %vm837, %v809, %v836
    %839 = vst.msk [vmem:[#allocation2 + $0xc] sm:$0x1] %vm214, %v838
    %vm840 = vcmp.gt.s32.totalorder %v159, %v838
    %vm841 = vcmp.gt.s32.totalorder %v160, %v838
    %vm842 = vcmp.gt.s32.totalorder %v161, %v838
    %v843 = vsel %vm840, %v159, 2147483647
    %v844 = vsel %vm841, %v160, 2147483647
    %v845 = vsel %vm842, %v161, 2147483647
    %v846 = vsel %vm168, %v843, 2147483647
    %v847 = vsel %vm168, %v844, 2147483647
    %v848 = vsel %vm168, %v845, 2147483647
    %vm849 = vcmp.lt.s32.totalorder %v846, %v847
    %v850 = vsel %vm849, %v846, %v847
    %vm851 = vcmp.lt.s32.totalorder %v850, %v848
    %v852 = vsel %vm851, %v850, %v848
    %v853 = vrot.slane %v852, 4
    %vm854 = vcmp.lt.s32.totalorder %v852, %v853
    %v855 = vsel %vm854, %v852, %v853
    %v856 = vrot.slane %v855, 2
    %vm857 = vcmp.lt.s32.totalorder %v855, %v856
    %v858 = vsel %vm857, %v855, %v856
    %v859 = vrot.slane %v858, 1
    %vm860 = vcmp.lt.s32.totalorder %v858, %v859
    %v861 = vsel %vm860, %v858, %v859
    %vm862 = vcmp.gt.s32.totalorder %v155, %v838
    %vm863 = vcmp.gt.s32.totalorder %v156, %v838
    %vm864 = vcmp.gt.s32.totalorder %v157, %v838
    %vm865 = vcmp.gt.s32.totalorder %v158, %v838
    %v866 = vsel %vm862, %v155, 2147483647
    %v867 = vsel %vm863, %v156, 2147483647
    %v868 = vsel %vm864, %v157, 2147483647
    %v869 = vsel %vm865, %v158, 2147483647
    %v870 = vsel %vm168, %v866, 2147483647
    %v871 = vsel %vm168, %v867, 2147483647
    %v872 = vsel %vm168, %v868, 2147483647
    %v873 = vsel %vm168, %v869, 2147483647
    %vm874 = vcmp.lt.s32.totalorder %v870, %v871
    %v875 = vsel %vm874, %v870, %v871
    %vm876 = vcmp.lt.s32.totalorder %v872, %v873
    %v877 = vsel %vm876, %v872, %v873
    %vm878 = vcmp.lt.s32.totalorder %v875, %v877
    %v879 = vsel %vm878, %v875, %v877
    %v880 = vrot.slane %v879, 4
    %vm881 = vcmp.lt.s32.totalorder %v879, %v880
    %v882 = vsel %vm881, %v879, %v880
    %v883 = vrot.slane %v882, 2
    %vm884 = vcmp.lt.s32.totalorder %v882, %v883
    %v885 = vsel %vm884, %v882, %v883
    %v886 = vrot.slane %v885, 1
    %vm887 = vcmp.lt.s32.totalorder %v885, %v886
    %v888 = vsel %vm887, %v885, %v886
    %vm889 = vcmp.lt.s32.totalorder %v861, %v888
    %v890 = vsel %vm889, %v861, %v888
    %891 = vst.msk [vmem:[#allocation2 + $0xd] sm:$0x1] %vm214, %v890
    %vm892 = vcmp.gt.s32.totalorder %v159, %v890
    %vm893 = vcmp.gt.s32.totalorder %v160, %v890
    %vm894 = vcmp.gt.s32.totalorder %v161, %v890
    %v895 = vsel %vm892, %v159, 2147483647
    %v896 = vsel %vm893, %v160, 2147483647
    %v897 = vsel %vm894, %v161, 2147483647
    %v898 = vsel %vm168, %v895, 2147483647
    %v899 = vsel %vm168, %v896, 2147483647
    %v900 = vsel %vm168, %v897, 2147483647
    %vm901 = vcmp.lt.s32.totalorder %v898, %v899
    %v902 = vsel %vm901, %v898, %v899
    %vm903 = vcmp.lt.s32.totalorder %v902, %v900
    %v904 = vsel %vm903, %v902, %v900
    %v905 = vrot.slane %v904, 4
    %vm906 = vcmp.lt.s32.totalorder %v904, %v905
    %v907 = vsel %vm906, %v904, %v905
    %v908 = vrot.slane %v907, 2
    %vm909 = vcmp.lt.s32.totalorder %v907, %v908
    %v910 = vsel %vm909, %v907, %v908
    %v911 = vrot.slane %v910, 1
    %vm912 = vcmp.lt.s32.totalorder %v910, %v911
    %v913 = vsel %vm912, %v910, %v911
    %vm914 = vcmp.gt.s32.totalorder %v155, %v890
    %vm915 = vcmp.gt.s32.totalorder %v156, %v890
    %vm916 = vcmp.gt.s32.totalorder %v157, %v890
    %vm917 = vcmp.gt.s32.totalorder %v158, %v890
    %v918 = vsel %vm914, %v155, 2147483647
    %v919 = vsel %vm915, %v156, 2147483647
    %v920 = vsel %vm916, %v157, 2147483647
    %v921 = vsel %vm917, %v158, 2147483647
    %v922 = vsel %vm168, %v918, 2147483647
    %v923 = vsel %vm168, %v919, 2147483647
    %v924 = vsel %vm168, %v920, 2147483647
    %v925 = vsel %vm168, %v921, 2147483647
    %vm926 = vcmp.lt.s32.totalorder %v922, %v923
    %v927 = vsel %vm926, %v922, %v923
    %vm928 = vcmp.lt.s32.totalorder %v924, %v925
    %v929 = vsel %vm928, %v924, %v925
    %vm930 = vcmp.lt.s32.totalorder %v927, %v929
    %v931 = vsel %vm930, %v927, %v929
    %v932 = vrot.slane %v931, 4
    %vm933 = vcmp.lt.s32.totalorder %v931, %v932
    %v934 = vsel %vm933, %v931, %v932
    %v935 = vrot.slane %v934, 2
    %vm936 = vcmp.lt.s32.totalorder %v934, %v935
    %v937 = vsel %vm936, %v934, %v935
    %v938 = vrot.slane %v937, 1
    %vm939 = vcmp.lt.s32.totalorder %v937, %v938
    %v940 = vsel %vm939, %v937, %v938
    %vm941 = vcmp.lt.s32.totalorder %v913, %v940
    %v942 = vsel %vm941, %v913, %v940
    %943 = vst.msk [vmem:[#allocation2 + $0xe] sm:$0x1] %vm214, %v942
    %vm944 = vcmp.gt.s32.totalorder %v159, %v942
    %vm945 = vcmp.gt.s32.totalorder %v160, %v942
    %vm946 = vcmp.gt.s32.totalorder %v161, %v942
    %v947 = vsel %vm944, %v159, 2147483647
    %v948 = vsel %vm945, %v160, 2147483647
    %v949 = vsel %vm946, %v161, 2147483647
    %v950 = vsel %vm168, %v947, 2147483647
    %v951 = vsel %vm168, %v948, 2147483647
    %v952 = vsel %vm168, %v949, 2147483647
    %vm953 = vcmp.lt.s32.totalorder %v950, %v951
    %v954 = vsel %vm953, %v950, %v951
    %vm955 = vcmp.lt.s32.totalorder %v954, %v952
    %v956 = vsel %vm955, %v954, %v952
    %v957 = vrot.slane %v956, 4
    %vm958 = vcmp.lt.s32.totalorder %v956, %v957
    %v959 = vsel %vm958, %v956, %v957
    %v960 = vrot.slane %v959, 2
    %vm961 = vcmp.lt.s32.totalorder %v959, %v960
    %v962 = vsel %vm961, %v959, %v960
    %v963 = vrot.slane %v962, 1
    %vm964 = vcmp.lt.s32.totalorder %v962, %v963
    %v965 = vsel %vm964, %v962, %v963
    %vm966 = vcmp.gt.s32.totalorder %v155, %v942
    %vm967 = vcmp.gt.s32.totalorder %v156, %v942
    %vm968 = vcmp.gt.s32.totalorder %v157, %v942
    %vm969 = vcmp.gt.s32.totalorder %v158, %v942
    %v970 = vsel %vm966, %v155, 2147483647
    %v971 = vsel %vm967, %v156, 2147483647
    %v972 = vsel %vm968, %v157, 2147483647
    %v973 = vsel %vm969, %v158, 2147483647
    %v974 = vsel %vm168, %v970, 2147483647
    %v975 = vsel %vm168, %v971, 2147483647
    %v976 = vsel %vm168, %v972, 2147483647
    %v977 = vsel %vm168, %v973, 2147483647
    %vm978 = vcmp.lt.s32.totalorder %v974, %v975
    %v979 = vsel %vm978, %v974, %v975
    %vm980 = vcmp.lt.s32.totalorder %v976, %v977
    %v981 = vsel %vm980, %v976, %v977
    %vm982 = vcmp.lt.s32.totalorder %v979, %v981
    %v983 = vsel %vm982, %v979, %v981
    %v984 = vrot.slane %v983, 4
    %vm985 = vcmp.lt.s32.totalorder %v983, %v984
    %v986 = vsel %vm985, %v983, %v984
    %v987 = vrot.slane %v986, 2
    %vm988 = vcmp.lt.s32.totalorder %v986, %v987
    %v989 = vsel %vm988, %v986, %v987
    %v990 = vrot.slane %v989, 1
    %vm991 = vcmp.lt.s32.totalorder %v989, %v990
    %v992 = vsel %vm991, %v989, %v990
    %vm993 = vcmp.lt.s32.totalorder %v965, %v992
    %v994 = vsel %vm993, %v965, %v992
    %995 = vst.msk [vmem:[#allocation2 + $0xf] sm:$0x1] %vm214, %v994
    %vm996 = vcmp.gt.s32.totalorder %v159, %v994
    %vm997 = vcmp.gt.s32.totalorder %v160, %v994
    %vm998 = vcmp.gt.s32.totalorder %v161, %v994
    %v999 = vsel %vm996, %v159, 2147483647
    %v1000 = vsel %vm997, %v160, 2147483647
    %v1001 = vsel %vm998, %v161, 2147483647
    %v1002 = vsel %vm168, %v999, 2147483647
    %v1003 = vsel %vm168, %v1000, 2147483647
    %v1004 = vsel %vm168, %v1001, 2147483647
    %vm1005 = vcmp.lt.s32.totalorder %v1002, %v1003
    %v1006 = vsel %vm1005, %v1002, %v1003
    %vm1007 = vcmp.lt.s32.totalorder %v1006, %v1004
    %v1008 = vsel %vm1007, %v1006, %v1004
    %v1009 = vrot.slane %v1008, 4
    %vm1010 = vcmp.lt.s32.totalorder %v1008, %v1009
    %v1011 = vsel %vm1010, %v1008, %v1009
    %v1012 = vrot.slane %v1011, 2
    %vm1013 = vcmp.lt.s32.totalorder %v1011, %v1012
    %v1014 = vsel %vm1013, %v1011, %v1012
    %v1015 = vrot.slane %v1014, 1
    %vm1016 = vcmp.lt.s32.totalorder %v1014, %v1015
    %v1017 = vsel %vm1016, %v1014, %v1015
    %vm1018 = vcmp.gt.s32.totalorder %v155, %v994
    %vm1019 = vcmp.gt.s32.totalorder %v156, %v994
    %vm1020 = vcmp.gt.s32.totalorder %v157, %v994
    %vm1021 = vcmp.gt.s32.totalorder %v158, %v994
    %v1022 = vsel %vm1018, %v155, 2147483647
    %v1023 = vsel %vm1019, %v156, 2147483647
    %v1024 = vsel %vm1020, %v157, 2147483647
    %v1025 = vsel %vm1021, %v158, 2147483647
    %v1026 = vsel %vm168, %v1022, 2147483647
    %v1027 = vsel %vm168, %v1023, 2147483647
    %v1028 = vsel %vm168, %v1024, 2147483647
    %v1029 = vsel %vm168, %v1025, 2147483647
    %vm1030 = vcmp.lt.s32.totalorder %v1026, %v1027
    %v1031 = vsel %vm1030, %v1026, %v1027
    %vm1032 = vcmp.lt.s32.totalorder %v1028, %v1029
    %v1033 = vsel %vm1032, %v1028, %v1029
    %vm1034 = vcmp.lt.s32.totalorder %v1031, %v1033
    %v1035 = vsel %vm1034, %v1031, %v1033
    %v1036 = vrot.slane %v1035, 4
    %vm1037 = vcmp.lt.s32.totalorder %v1035, %v1036
    %v1038 = vsel %vm1037, %v1035, %v1036
    %v1039 = vrot.slane %v1038, 2
    %vm1040 = vcmp.lt.s32.totalorder %v1038, %v1039
    %v1041 = vsel %vm1040, %v1038, %v1039
    %v1042 = vrot.slane %v1041, 1
    %vm1043 = vcmp.lt.s32.totalorder %v1041, %v1042
    %v1044 = vsel %vm1043, %v1041, %v1042
    %vm1045 = vcmp.lt.s32.totalorder %v1017, %v1044
    %v1046 = vsel %vm1045, %v1017, %v1044
    %1047 = vst.msk [vmem:[#allocation2 + $0x10] sm:$0x1] %vm214, %v1046
    %vm1048 = vcmp.gt.s32.totalorder %v159, %v1046
    %vm1049 = vcmp.gt.s32.totalorder %v160, %v1046
    %vm1050 = vcmp.gt.s32.totalorder %v161, %v1046
    %v1051 = vsel %vm1048, %v159, 2147483647
    %v1052 = vsel %vm1049, %v160, 2147483647
    %v1053 = vsel %vm1050, %v161, 2147483647
    %v1054 = vsel %vm168, %v1051, 2147483647
    %v1055 = vsel %vm168, %v1052, 2147483647
    %v1056 = vsel %vm168, %v1053, 2147483647
    %vm1057 = vcmp.lt.s32.totalorder %v1054, %v1055
    %v1058 = vsel %vm1057, %v1054, %v1055
    %vm1059 = vcmp.lt.s32.totalorder %v1058, %v1056
    %v1060 = vsel %vm1059, %v1058, %v1056
    %v1061 = vrot.slane %v1060, 4
    %vm1062 = vcmp.lt.s32.totalorder %v1060, %v1061
    %v1063 = vsel %vm1062, %v1060, %v1061
    %v1064 = vrot.slane %v1063, 2
    %vm1065 = vcmp.lt.s32.totalorder %v1063, %v1064
    %v1066 = vsel %vm1065, %v1063, %v1064
    %v1067 = vrot.slane %v1066, 1
    %vm1068 = vcmp.lt.s32.totalorder %v1066, %v1067
    %v1069 = vsel %vm1068, %v1066, %v1067
    %vm1070 = vcmp.gt.s32.totalorder %v155, %v1046
    %vm1071 = vcmp.gt.s32.totalorder %v156, %v1046
    %vm1072 = vcmp.gt.s32.totalorder %v157, %v1046
    %vm1073 = vcmp.gt.s32.totalorder %v158, %v1046
    %v1074 = vsel %vm1070, %v155, 2147483647
    %v1075 = vsel %vm1071, %v156, 2147483647
    %v1076 = vsel %vm1072, %v157, 2147483647
    %v1077 = vsel %vm1073, %v158, 2147483647
    %v1078 = vsel %vm168, %v1074, 2147483647
    %v1079 = vsel %vm168, %v1075, 2147483647
    %v1080 = vsel %vm168, %v1076, 2147483647
    %v1081 = vsel %vm168, %v1077, 2147483647
    %vm1082 = vcmp.lt.s32.totalorder %v1078, %v1079
    %v1083 = vsel %vm1082, %v1078, %v1079
    %vm1084 = vcmp.lt.s32.totalorder %v1080, %v1081
    %v1085 = vsel %vm1084, %v1080, %v1081
    %vm1086 = vcmp.lt.s32.totalorder %v1083, %v1085
    %v1087 = vsel %vm1086, %v1083, %v1085
    %v1088 = vrot.slane %v1087, 4
    %vm1089 = vcmp.lt.s32.totalorder %v1087, %v1088
    %v1090 = vsel %vm1089, %v1087, %v1088
    %v1091 = vrot.slane %v1090, 2
    %vm1092 = vcmp.lt.s32.totalorder %v1090, %v1091
    %v1093 = vsel %vm1092, %v1090, %v1091
    %v1094 = vrot.slane %v1093, 1
    %vm1095 = vcmp.lt.s32.totalorder %v1093, %v1094
    %v1096 = vsel %vm1095, %v1093, %v1094
    %vm1097 = vcmp.lt.s32.totalorder %v1069, %v1096
    %v1098 = vsel %vm1097, %v1069, %v1096
    %1099 = vst.msk [vmem:[#allocation2 + $0x11] sm:$0x1] %vm214, %v1098
    %vm1100 = vcmp.gt.s32.totalorder %v159, %v1098
    %vm1101 = vcmp.gt.s32.totalorder %v160, %v1098
    %vm1102 = vcmp.gt.s32.totalorder %v161, %v1098
    %v1103 = vsel %vm1100, %v159, 2147483647
    %v1104 = vsel %vm1101, %v160, 2147483647
    %v1105 = vsel %vm1102, %v161, 2147483647
    %v1106 = vsel %vm168, %v1103, 2147483647
    %v1107 = vsel %vm168, %v1104, 2147483647
    %v1108 = vsel %vm168, %v1105, 2147483647
    %vm1109 = vcmp.lt.s32.totalorder %v1106, %v1107
    %v1110 = vsel %vm1109, %v1106, %v1107
    %vm1111 = vcmp.lt.s32.totalorder %v1110, %v1108
    %v1112 = vsel %vm1111, %v1110, %v1108
    %v1113 = vrot.slane %v1112, 4
    %vm1114 = vcmp.lt.s32.totalorder %v1112, %v1113
    %v1115 = vsel %vm1114, %v1112, %v1113
    %v1116 = vrot.slane %v1115, 2
    %vm1117 = vcmp.lt.s32.totalorder %v1115, %v1116
    %v1118 = vsel %vm1117, %v1115, %v1116
    %v1119 = vrot.slane %v1118, 1
    %vm1120 = vcmp.lt.s32.totalorder %v1118, %v1119
    %v1121 = vsel %vm1120, %v1118, %v1119
    %vm1122 = vcmp.gt.s32.totalorder %v155, %v1098
    %vm1123 = vcmp.gt.s32.totalorder %v156, %v1098
    %vm1124 = vcmp.gt.s32.totalorder %v157, %v1098
    %vm1125 = vcmp.gt.s32.totalorder %v158, %v1098
    %v1126 = vsel %vm1122, %v155, 2147483647
    %v1127 = vsel %vm1123, %v156, 2147483647
    %v1128 = vsel %vm1124, %v157, 2147483647
    %v1129 = vsel %vm1125, %v158, 2147483647
    %v1130 = vsel %vm168, %v1126, 2147483647
    %v1131 = vsel %vm168, %v1127, 2147483647
    %v1132 = vsel %vm168, %v1128, 2147483647
    %v1133 = vsel %vm168, %v1129, 2147483647
    %vm1134 = vcmp.lt.s32.totalorder %v1130, %v1131
    %v1135 = vsel %vm1134, %v1130, %v1131
    %vm1136 = vcmp.lt.s32.totalorder %v1132, %v1133
    %v1137 = vsel %vm1136, %v1132, %v1133
    %vm1138 = vcmp.lt.s32.totalorder %v1135, %v1137
    %v1139 = vsel %vm1138, %v1135, %v1137
    %v1140 = vrot.slane %v1139, 4
    %vm1141 = vcmp.lt.s32.totalorder %v1139, %v1140
    %v1142 = vsel %vm1141, %v1139, %v1140
    %v1143 = vrot.slane %v1142, 2
    %vm1144 = vcmp.lt.s32.totalorder %v1142, %v1143
    %v1145 = vsel %vm1144, %v1142, %v1143
    %v1146 = vrot.slane %v1145, 1
    %vm1147 = vcmp.lt.s32.totalorder %v1145, %v1146
    %v1148 = vsel %vm1147, %v1145, %v1146
    %vm1149 = vcmp.lt.s32.totalorder %v1121, %v1148
    %v1150 = vsel %vm1149, %v1121, %v1148
    %1151 = vst.msk [vmem:[#allocation2 + $0x12] sm:$0x1] %vm214, %v1150
    // Predicated region
    $region14: #{tpu_custom_call.1} parent=1 // pred_check
      %p1152 = pneg %p14
    $region15: #{tpu_custom_call.1} parent=1 // pred_check_branch
      %1154 = sbr.rel (%p1152) target = $region17
    $region16: #{tpu_custom_call.1} parent=1 // pred_region
      %v1155 = vld [vmem:[#allocation2] sm:$0xff]
      %v1156 = vld [vmem:[#allocation2 + $0x8] sm:$0xff]
      %v1157 = vld [vmem:[#allocation2 + $0x10] sm:$0x7]
      %v1158 = vand.u32 %v1155, 31
      %v1159 = vand.u32 %v1156, 31
      %v1160 = vand.u32 %v1157, 31
      %1161 = vst.msk [vmem:[#allocation3] sm:$0xff] %vm168, %v1158
      %1162 = vst.msk [vmem:[#allocation3 + $0x8] sm:$0xff] %vm168, %v1159
      %vm1163 = vcmask 256000
      %1164 = vst.msk [vmem:[#allocation3 + $0x10] sm:$0x7] %vm1163, %v1160
    $region17: #{tpu_custom_call.1} parent=1 // pred_fallthru
      _
    // Predicated region
    $region18: #{tpu_custom_call.1} parent=1 // pred_check
      _
    $region19: #{tpu_custom_call.1} parent=1 // pred_check_branch
      %1166 = sbr.rel (0) target = $region21
    $region20: #{tpu_custom_call.1} parent=1 // pred_region
      %s1168 = ssub.s32 384, 384
      %1169 = vsyncadd [#allocation4], %s1168
      %s1170 = sshll.u32 [#allocation3], 4
      %s1171 = int_to_ptr.vmem [resolvable:$true] %s1170
      %1176 = dma.vmem_to_hbm [thread:$0]  %s1171, 384, %s2, [#allocation4], 128, 128, 8
    $region21: #{tpu_custom_call.1} parent=1 // pred_fallthru
      _
    // Predicated region
    $region22: #{tpu_custom_call.1} parent=1 // pred_check
      _
    $region23: #{tpu_custom_call.1} parent=1 // pred_check_branch
      %1178 = sbr.rel (0) target = $region25
    $region24: #{tpu_custom_call.1} parent=1 // pred_region
      %1179 = dma.done [#allocation4], 384
    $region25: #{tpu_custom_call.1} parent=1 // pred_fallthru
      _
    %1180 = vsyncpa [#allocation4], 1

</llo_original>
